<compile_context>
chip_gen: v7x
topology: tpu7x:2x2x1
jax: 0.10.0
libtpu: 0.0.40
codegen_flags: <defaults>
</compile_context>

<pallas_src>
import functools
import numpy as np

import jax
import jax.numpy as jnp
from jax.experimental import pallas as pl
from jax.experimental.pallas import tpu as pltpu


# --------------------------------------------------------------------------------------
# Kernel
# --------------------------------------------------------------------------------------
def _spectral_conv1d_kernel(x_ref, f_ref, w1_ref, w2_ref, cinv_ref, o_ref, *, precision=None):
    # x_ref    : (bt*Cin_p, N)        current batch tile, channels flattened into rows
    # f_ref    : (N, Wp)              fused fwd basis   [cos | -sin] / sqrt(N)
    # w1_ref   : (Cin_p, Cout_p, Wp)  packed weights    [ Wr | Wr]
    # w2_ref   : (Cin_p, Cout_p, Wp)  packed weights    [-Wi | Wi]
    # cinv_ref : (Wp, N)              fused inverse basis (Hermitian-doubled)
    # o_ref    : (bt*Cout_p, N)
    cin_p, cout_p, wp = w1_ref.shape
    bt = x_ref.shape[0] // cin_p
    mh = wp // 2

    # ---- forward truncated orthonormal rDFT: one MXU matmul ---------------------------
    # s = [Xr | Xi] in a single lane-dense slab (padded modes have zero basis columns).
    s = jnp.dot(x_ref[...], f_ref[...],
                preferred_element_type=jnp.float32, precision=precision)
    # Swapped halves [Xi | Xr] via a lane rotation (XLU slot; no slicing / relayout).
    s_sw = pltpu.roll(s, shift=mh, axis=1)

    # Leading-dim regroup only; Cin_p % 8 == 0 keeps these layout-preserving (free).
    s = s.reshape(bt, cin_p, wp)
    s_sw = s_sw.reshape(bt, cin_p, wp)

    # ---- complex channel mix (compl_mul1d), accumulated over Cin ----------------------
    #   [Or | Oi] = sum_ci  [Xr|Xi]*[Wr|Wr]  +  [Xi|Xr]*[-Wi|Wi]
    # Live VPU state stays at (bt, Cout_p, Wp) instead of a (bt,Cout,Cin,Mp) broadcast.
    acc = jnp.zeros((bt, cout_p, wp), jnp.float32)
    for ci in range(cin_p):                      # static unrolled loop; Cin_p is small
        acc = (acc
               + s[:, ci:ci + 1, :] * w1_ref[ci][None, :, :]
               + s_sw[:, ci:ci + 1, :] * w2_ref[ci][None, :, :])

    # ---- inverse orthonormal rDFT of the packed half spectrum: one MXU matmul ---------
    # (Imag parts of DC / Nyquist bins are implicitly dropped: their sin rows are 0.)
    of = acc.reshape(bt * cout_p, wp).astype(cinv_ref.dtype)
    y = jnp.dot(of, cinv_ref[...],
                preferred_element_type=jnp.float32, precision=precision)
    o_ref[...] = y.astype(o_ref.dtype)


# --------------------------------------------------------------------------------------
# Host-side helpers
# --------------------------------------------------------------------------------------
def _round_up(v, m):
    return -(-v // m) * m


def _tpu_vmem_and_cores():
    """(physical VMEM bytes, TensorCores per chip) with a conservative fallback."""
    try:
        cap = int(pltpu.get_tpu_info().vmem_capacity_bytes)
    except Exception:
        cap = 64 * 1024 * 1024              # safe lower bound on every generation
    # v7x: 64 MiB VMEM & 2 TensorCores/chip; v5e/v6e: 128 MiB & 1 TensorCore.
    n_cores = 2 if cap <= 64 * 1024 * 1024 else 1
    return cap, n_cores


def _single_buffer_supported():
    try:
        pl.BlockSpec((8, 128), lambda i: (0, 0), pipeline_mode=pl.Buffered(1))
        return True
    except Exception:
        return False


_SINGLE_BUFFER_OK = _single_buffer_supported()


def _invariant_spec(shape, index_map, single_buffer):
    """BlockSpec for a grid-invariant operand (constant index_map): single-buffer it when
    the installed JAX supports pipeline_mode, halving its VMEM footprint."""
    if single_buffer:
        return pl.BlockSpec(shape, index_map, pipeline_mode=pl.Buffered(1))
    return pl.BlockSpec(shape, index_map)


@functools.lru_cache(maxsize=None)
def _dft_bases(n, m, mh, dtype_name):
    """Cached fused truncated-rDFT bases.

    fwd (n, 2*mh):  x @ fwd = [Re rfft_ortho(x)[:m] | Im rfft_ortho(x)[:m]] (zero-padded)
    inv (2*mh, n):  [Or | Oi] @ inv = irfft_ortho(zero-padded half spectrum, n)
    """
    dt = jnp.dtype(dtype_name)
    k = np.arange(mh)
    valid = (k < m).astype(np.float64)                          # zero out padded modes
    ang = 2.0 * np.pi * np.outer(np.arange(n), k) / n           # (n, mh)
    inv_sqrt_n = 1.0 / np.sqrt(n)
    cos = np.cos(ang) * inv_sqrt_n * valid
    sin = np.sin(ang) * inv_sqrt_n * valid
    fwd = np.concatenate([cos, -sin], axis=1)                   # (n, 2*mh)
    # Hermitian doubling for the one-sided inverse (DC / Nyquist counted once).
    dbl = np.where((k == 0) | ((n % 2 == 0) & (k == n // 2)), 1.0, 2.0) * valid
    inv = np.concatenate([dbl[:, None] * cos.T, -dbl[:, None] * sin.T], axis=0)  # (2*mh, n)
    return jnp.asarray(fwd, dt), jnp.asarray(inv, dt)


def _pack_weights(wr, wi, cin_p, cout_p, mh, dtype):
    """(Cin, Cout, M) real/imag weights -> packed (Cin_p, Cout_p, 2*mh) pairs
    [Wr | Wr] and [-Wi | Wi] that multiply [Xr | Xi] and [Xi | Xr] respectively."""
    cin, cout, m = wr.shape
    pad = ((0, cin_p - cin), (0, cout_p - cout), (0, mh - m))
    wr_p = jnp.pad(wr, pad)
    wi_p = jnp.pad(wi, pad)
    w1 = jnp.concatenate([wr_p, wr_p], axis=-1).astype(dtype)
    w2 = jnp.concatenate([-wi_p, wi_p], axis=-1).astype(dtype)
    return w1, w2


def _pick_batch_tile(B, cin_p, cout_p, n, wp, in_item, out_item, budget, n_cores, inv_nbuf):
    """Largest batch tile that (a) divides B, (b) keeps >= n_cores grid steps on
    multi-TensorCore chips, and (c) fits a VMEM model covering the double-buffered I/O
    tiles, the (possibly single-buffered) invariant operands AND the in-kernel
    temporaries (DFT output, rolled copy, mix accumulator/broadcasts, iDFT result)."""
    def vmem_bytes(t):
        x_blk = 2 * t * cin_p * n * in_item                     # double-buffered input tile
        o_blk = 2 * t * cout_p * n * out_item                   # double-buffered output tile
        consts = inv_nbuf * (2 * n * wp + 2 * cin_p * cout_p * wp) * in_item
        temps = (2 * t * cin_p * wp                             # [Xr|Xi] + rolled copy (f32)
                 + 3 * t * cout_p * wp                          # accumulator + broadcast temps
                 + t * cout_p * n) * 4                          # iDFT result before the store
        temps += t * cout_p * wp * in_item                      # cast feeding the 2nd matmul
        return int(1.15 * (x_blk + o_blk + consts + temps))     # headroom for MXU scratch etc.

    if n_cores > 1 and B >= n_cores:
        bt = max(1, B // n_cores)         # only force >=2 grid steps on 2-TC chips (v7x)
    else:
        bt = B
    while bt > 1 and vmem_bytes(bt) > budget:
        bt -= 1
    while B % bt:                         # exact blocking (no ragged batch tile)
        bt -= 1
    return bt


# --------------------------------------------------------------------------------------
# Public wrapper
# --------------------------------------------------------------------------------------
def spectral_conv1d(x, wr, wi, *, dtype=jnp.bfloat16, precision=None):
    """FNO SpectralConv1d forward.

    x       : (B, Cin, N) float
    wr, wi  : (Cin, Cout, M) real / imag parts of weights1
    dtype   : storage dtype for x / DFT bases / weights inside the kernel.  bf16 is the
              fast default (MXU default precision truncates f32 to bf16 anyway); use
              jnp.float32 (+ precision=lax.Precision.HIGHEST) when tight accuracy matters.
    returns : (B, Cout, N) in x.dtype
    """
    B, Cin, N = x.shape
    cin_w, Cout, M = wr.shape
    assert cin_w == Cin and wi.shape == wr.shape and M <= N // 2 + 1

    dt = jnp.dtype(dtype)
    out_dtype = x.dtype

    cin_p = _round_up(Cin, 8)             # channels -> sublane multiples (dense vregs)
    cout_p = _round_up(Cout, 8)
    mh = _round_up(M, 64)                 # packed half-spectrum width; Wp = 2*mh % 128 == 0
    wp = 2 * mh

    fwd_basis, inv_basis = _dft_bases(N, M, mh, dt.name)
    w1, w2 = _pack_weights(wr, wi, cin_p, cout_p, mh, dt)

    x_p = jnp.pad(x, ((0, 0), (0, cin_p - Cin), (0, 0))) if cin_p != Cin else x
    x_flat = x_p.astype(dt).reshape(B * cin_p, N)         # 2-D, sublane/lane dense slab

    cap, n_cores = _tpu_vmem_and_cores()
    single = _SINGLE_BUFFER_OK
    bt = _pick_batch_tile(B, cin_p, cout_p, N, wp,
                          in_item=dt.itemsize, out_item=jnp.dtype(out_dtype).itemsize,
                          budget=int(cap * 0.70), n_cores=n_cores,
                          inv_nbuf=1 if single else 2)
    grid = (B // bt,)

    kernel = functools.partial(_spectral_conv1d_kernel, precision=precision)

    # TODO(synk): for very large N (bases no longer comfortably VMEM-resident, esp. on
    # v7x's 64 MiB) add a grid axis tiling N: accumulate the forward DFT over N-chunks and
    # stream inverse-basis columns instead of keeping both bases fully resident.
    def build(single_buffer):
        return pl.pallas_call(
            kernel,
            out_shape=jax.ShapeDtypeStruct((B * cout_p, N), out_dtype),
            grid_spec=pltpu.PrefetchScalarGridSpec(
                num_scalar_prefetch=0,
                grid=grid,
                in_specs=[
                    pl.BlockSpec((bt * cin_p, N), lambda b: (b, 0)),                 # x tile
                    _invariant_spec((N, wp), lambda b: (0, 0), single_buffer),       # fwd basis
                    _invariant_spec((cin_p, cout_p, wp), lambda b: (0, 0, 0), single_buffer),
                    _invariant_spec((cin_p, cout_p, wp), lambda b: (0, 0, 0), single_buffer),
                    _invariant_spec((wp, N), lambda b: (0, 0), single_buffer),       # inv basis
                ],
                out_specs=pl.BlockSpec((bt * cout_p, N), lambda b: (b, 0)),
            ),
            compiler_params=pltpu.CompilerParams(
                dimension_semantics=("parallel",),
                vmem_limit_bytes=int(cap * 0.80),     # ~51 MiB on v7x, ~102 MiB on v5e/v6e
            ),
        )

    args = (x_flat, fwd_basis, w1, w2, inv_basis)
    try:
        out_flat = build(single)(*args)
    except Exception:
        if not single:
            raise
        out_flat = build(False)(*args)    # graceful fallback for JAX without Buffered(1)

    out = out_flat.reshape(B, cout_p, N)
    return out if cout_p == Cout else out[:, :Cout, :]


# --------------------------------------------------------------------------------------
if __name__ == "__main__":
    # Small shapes consistent with the module (in_channels == out_channels keeps the
    # original out_ft slice assignment shape-valid).  B=4 exercises the batch-tiled grid.
    B, Cin, Cout, N, M = 4, 4, 4, 16, 5

    key = jax.random.PRNGKey(0)
    kx, kw = jax.random.split(key)
    x = jax.random.normal(kx, (B, Cin, N), dtype=jnp.float32)

    # Deterministic parameter init mirroring:  scale * torch.rand(Cin, Cout, M, 2)
    scale = 1.0 / (Cin * Cout)
    weights1 = scale * jax.random.uniform(kw, (Cin, Cout, M, 2), dtype=jnp.float32)
    wr, wi = weights1[..., 0], weights1[..., 1]

    out_fast = spectral_conv1d(x, wr, wi)                        # bf16 fast path (default)
    out_f32 = spectral_conv1d(x, wr, wi, dtype=jnp.float32)      # f32-storage path
    jax.block_until_ready((out_fast, out_f32))

    # Pure-JAX reference (orthonormal rfft / irfft path of the canonical FNO layer).
    x_ft = jnp.fft.rfft(x, norm="ortho")                         # (B, Cin, N//2+1) complex
    wc = (wr + 1j * wi).astype(jnp.complex64)
    out_ft = jnp.einsum("bim,iom->bom", x_ft[:, :, :M], wc)      # (B, Cout, M)
    full = jnp.zeros((B, Cout, N // 2 + 1), jnp.complex64).at[:, :, :M].set(out_ft)
    ref = jnp.fft.irfft(full, n=N, norm="ortho")                 # (B, Cout, N)

    assert out_fast.shape == (B, Cout, N) and out_f32.shape == (B, Cout, N)
    assert jnp.allclose(out_f32, ref, atol=1e-3), "f32 Pallas kernel mismatch vs FFT reference"
    assert jnp.allclose(out_fast, ref, atol=1e-2), "bf16 Pallas kernel mismatch vs FFT reference"
    print("KERNEL_OK")
</pallas_src>

<mosaic_0001>
module attributes {stable_mosaic.version = 11 : i64} {
  func.func @_spectral_conv1d_kernel(%arg0: i32, %arg1: memref<16x16xbf16, #tpu.memory_space<vmem>>, %arg2: memref<16x128xbf16, #tpu.memory_space<vmem>>, %arg3: memref<8x8x128xbf16, #tpu.memory_space<vmem>>, %arg4: memref<8x8x128xbf16, #tpu.memory_space<vmem>>, %arg5: memref<128x16xbf16, #tpu.memory_space<vmem>>, %arg6: memref<16x16xf32, #tpu.memory_space<vmem>>) attributes {dimension_semantics = [#tpu.dimension_semantics<parallel>], iteration_bounds = array<i64: 2>, scalar_prefetch = 0 : i64, scratch_operands = 0 : i64, tpu.core_type = #tpu.core_type<tc>, window_params = [{transform_indices = @transform_0, window_bounds = array<i64: 16, 16>}, {pipeline_mode = #tpu.pipeline_mode<synchronous>, transform_indices = @transform_1, window_bounds = array<i64: 16, 128>}, {pipeline_mode = #tpu.pipeline_mode<synchronous>, transform_indices = @transform_2, window_bounds = array<i64: 8, 8, 128>}, {pipeline_mode = #tpu.pipeline_mode<synchronous>, transform_indices = @transform_3, window_bounds = array<i64: 8, 8, 128>}, {pipeline_mode = #tpu.pipeline_mode<synchronous>, transform_indices = @transform_4, window_bounds = array<i64: 128, 16>}, {transform_indices = @transform_5, window_bounds = array<i64: 16, 16>}]} {
    %c0 = arith.constant 0 : index
    %c0_0 = arith.constant 0 : index
    %0 = vector.load %arg1[%c0, %c0_0] : memref<16x16xbf16, #tpu.memory_space<vmem>>, vector<16x16xbf16>
    %c0_1 = arith.constant 0 : index
    %c0_2 = arith.constant 0 : index
    %1 = vector.load %arg2[%c0_1, %c0_2] : memref<16x128xbf16, #tpu.memory_space<vmem>>, vector<16x128xbf16>
    %cst = arith.constant dense<0.000000e+00> : vector<16x128xf32>
    %2 = tpu.matmul %0, %1, %cst {dimension_numbers = #tpu.dot_dimension_numbers<[1], [0], [0], [1], [0, 0, 1, 1], [], []>} : vector<16x16xbf16>, vector<16x128xbf16>, vector<16x128xf32> -> vector<16x128xf32>
    %c64_i32 = arith.constant 64 : i32
    %3 = tpu.dynamic_rotate %2 by %c64_i32 dim 1 : vector<16x128xf32>, i32 -> vector<16x128xf32>
    %4 = vector.shape_cast %2 : vector<16x128xf32> to vector<2x8x128xf32>
    %5 = vector.shape_cast %3 : vector<16x128xf32> to vector<2x8x128xf32>
    %cst_3 = arith.constant 0.000000e+00 : f32
    %6 = vector.broadcast %cst_3 : f32 to vector<2x8x128xf32>
    %7 = vector.extract_strided_slice %4 {offsets = [0, 0, 0], sizes = [2, 1, 128], strides = [1, 1, 1]} : vector<2x8x128xf32> to vector<2x1x128xf32>
    %c0_4 = arith.constant 0 : index
    %c0_5 = arith.constant 0 : index
    %c0_6 = arith.constant 0 : index
    %8 = vector.load %arg3[%c0_4, %c0_5, %c0_6] : memref<8x8x128xbf16, #tpu.memory_space<vmem>>, vector<1x8x128xbf16>
    %9 = vector.shape_cast %8 : vector<1x8x128xbf16> to vector<8x128xbf16>
    %10 = vector.shape_cast %9 : vector<8x128xbf16> to vector<1x8x128xbf16>
    %11 = arith.extf %10 : vector<1x8x128xbf16> to vector<1x8x128xf32>
    %12 = vector.broadcast %7 : vector<2x1x128xf32> to vector<2x8x128xf32>
    %13 = vector.broadcast %11 : vector<1x8x128xf32> to vector<2x8x128xf32>
    %14 = arith.mulf %12, %13 : vector<2x8x128xf32>
    %15 = arith.addf %6, %14 : vector<2x8x128xf32>
    %16 = vector.extract_strided_slice %5 {offsets = [0, 0, 0], sizes = [2, 1, 128], strides = [1, 1, 1]} : vector<2x8x128xf32> to vector<2x1x128xf32>
    %c0_7 = arith.constant 0 : index
    %c0_8 = arith.constant 0 : index
    %c0_9 = arith.constant 0 : index
    %17 = vector.load %arg4[%c0_7, %c0_8, %c0_9] : memref<8x8x128xbf16, #tpu.memory_space<vmem>>, vector<1x8x128xbf16>
    %18 = vector.shape_cast %17 : vector<1x8x128xbf16> to vector<8x128xbf16>
    %19 = vector.shape_cast %18 : vector<8x128xbf16> to vector<1x8x128xbf16>
    %20 = arith.extf %19 : vector<1x8x128xbf16> to vector<1x8x128xf32>
    %21 = vector.broadcast %16 : vector<2x1x128xf32> to vector<2x8x128xf32>
    %22 = vector.broadcast %20 : vector<1x8x128xf32> to vector<2x8x128xf32>
    %23 = arith.mulf %21, %22 : vector<2x8x128xf32>
    %24 = arith.addf %15, %23 : vector<2x8x128xf32>
    %25 = vector.extract_strided_slice %4 {offsets = [0, 1, 0], sizes = [2, 1, 128], strides = [1, 1, 1]} : vector<2x8x128xf32> to vector<2x1x128xf32>
    %c1 = arith.constant 1 : index
    %c0_10 = arith.constant 0 : index
    %c0_11 = arith.constant 0 : index
    %26 = vector.load %arg3[%c1, %c0_10, %c0_11] : memref<8x8x128xbf16, #tpu.memory_space<vmem>>, vector<1x8x128xbf16>
    %27 = vector.shape_cast %26 : vector<1x8x128xbf16> to vector<8x128xbf16>
    %28 = vector.shape_cast %27 : vector<8x128xbf16> to vector<1x8x128xbf16>
    %29 = arith.extf %28 : vector<1x8x128xbf16> to vector<1x8x128xf32>
    %30 = vector.broadcast %25 : vector<2x1x128xf32> to vector<2x8x128xf32>
    %31 = vector.broadcast %29 : vector<1x8x128xf32> to vector<2x8x128xf32>
    %32 = arith.mulf %30, %31 : vector<2x8x128xf32>
    %33 = arith.addf %24, %32 : vector<2x8x128xf32>
    %34 = vector.extract_strided_slice %5 {offsets = [0, 1, 0], sizes = [2, 1, 128], strides = [1, 1, 1]} : vector<2x8x128xf32> to vector<2x1x128xf32>
    %c1_12 = arith.constant 1 : index
    %c0_13 = arith.constant 0 : index
    %c0_14 = arith.constant 0 : index
    %35 = vector.load %arg4[%c1_12, %c0_13, %c0_14] : memref<8x8x128xbf16, #tpu.memory_space<vmem>>, vector<1x8x128xbf16>
    %36 = vector.shape_cast %35 : vector<1x8x128xbf16> to vector<8x128xbf16>
    %37 = vector.shape_cast %36 : vector<8x128xbf16> to vector<1x8x128xbf16>
    %38 = arith.extf %37 : vector<1x8x128xbf16> to vector<1x8x128xf32>
    %39 = vector.broadcast %34 : vector<2x1x128xf32> to vector<2x8x128xf32>
    %40 = vector.broadcast %38 : vector<1x8x128xf32> to vector<2x8x128xf32>
    %41 = arith.mulf %39, %40 : vector<2x8x128xf32>
    %42 = arith.addf %33, %41 : vector<2x8x128xf32>
    %43 = vector.extract_strided_slice %4 {offsets = [0, 2, 0], sizes = [2, 1, 128], strides = [1, 1, 1]} : vector<2x8x128xf32> to vector<2x1x128xf32>
    %c2 = arith.constant 2 : index
    %c0_15 = arith.constant 0 : index
    %c0_16 = arith.constant 0 : index
    %44 = vector.load %arg3[%c2, %c0_15, %c0_16] : memref<8x8x128xbf16, #tpu.memory_space<vmem>>, vector<1x8x128xbf16>
    %45 = vector.shape_cast %44 : vector<1x8x128xbf16> to vector<8x128xbf16>
    %46 = vector.shape_cast %45 : vector<8x128xbf16> to vector<1x8x128xbf16>
    %47 = arith.extf %46 : vector<1x8x128xbf16> to vector<1x8x128xf32>
    %48 = vector.broadcast %43 : vector<2x1x128xf32> to vector<2x8x128xf32>
    %49 = vector.broadcast %47 : vector<1x8x128xf32> to vector<2x8x128xf32>
    %50 = arith.mulf %48, %49 : vector<2x8x128xf32>
    %51 = arith.addf %42, %50 : vector<2x8x128xf32>
    %52 = vector.extract_strided_slice %5 {offsets = [0, 2, 0], sizes = [2, 1, 128], strides = [1, 1, 1]} : vector<2x8x128xf32> to vector<2x1x128xf32>
    %c2_17 = arith.constant 2 : index
    %c0_18 = arith.constant 0 : index
    %c0_19 = arith.constant 0 : index
    %53 = vector.load %arg4[%c2_17, %c0_18, %c0_19] : memref<8x8x128xbf16, #tpu.memory_space<vmem>>, vector<1x8x128xbf16>
    %54 = vector.shape_cast %53 : vector<1x8x128xbf16> to vector<8x128xbf16>
    %55 = vector.shape_cast %54 : vector<8x128xbf16> to vector<1x8x128xbf16>
    %56 = arith.extf %55 : vector<1x8x128xbf16> to vector<1x8x128xf32>
    %57 = vector.broadcast %52 : vector<2x1x128xf32> to vector<2x8x128xf32>
    %58 = vector.broadcast %56 : vector<1x8x128xf32> to vector<2x8x128xf32>
    %59 = arith.mulf %57, %58 : vector<2x8x128xf32>
    %60 = arith.addf %51, %59 : vector<2x8x128xf32>
    %61 = vector.extract_strided_slice %4 {offsets = [0, 3, 0], sizes = [2, 1, 128], strides = [1, 1, 1]} : vector<2x8x128xf32> to vector<2x1x128xf32>
    %c3 = arith.constant 3 : index
    %c0_20 = arith.constant 0 : index
    %c0_21 = arith.constant 0 : index
    %62 = vector.load %arg3[%c3, %c0_20, %c0_21] : memref<8x8x128xbf16, #tpu.memory_space<vmem>>, vector<1x8x128xbf16>
    %63 = vector.shape_cast %62 : vector<1x8x128xbf16> to vector<8x128xbf16>
    %64 = vector.shape_cast %63 : vector<8x128xbf16> to vector<1x8x128xbf16>
    %65 = arith.extf %64 : vector<1x8x128xbf16> to vector<1x8x128xf32>
    %66 = vector.broadcast %61 : vector<2x1x128xf32> to vector<2x8x128xf32>
    %67 = vector.broadcast %65 : vector<1x8x128xf32> to vector<2x8x128xf32>
    %68 = arith.mulf %66, %67 : vector<2x8x128xf32>
    %69 = arith.addf %60, %68 : vector<2x8x128xf32>
    %70 = vector.extract_strided_slice %5 {offsets = [0, 3, 0], sizes = [2, 1, 128], strides = [1, 1, 1]} : vector<2x8x128xf32> to vector<2x1x128xf32>
    %c3_22 = arith.constant 3 : index
    %c0_23 = arith.constant 0 : index
    %c0_24 = arith.constant 0 : index
    %71 = vector.load %arg4[%c3_22, %c0_23, %c0_24] : memref<8x8x128xbf16, #tpu.memory_space<vmem>>, vector<1x8x128xbf16>
    %72 = vector.shape_cast %71 : vector<1x8x128xbf16> to vector<8x128xbf16>
    %73 = vector.shape_cast %72 : vector<8x128xbf16> to vector<1x8x128xbf16>
    %74 = arith.extf %73 : vector<1x8x128xbf16> to vector<1x8x128xf32>
    %75 = vector.broadcast %70 : vector<2x1x128xf32> to vector<2x8x128xf32>
    %76 = vector.broadcast %74 : vector<1x8x128xf32> to vector<2x8x128xf32>
    %77 = arith.mulf %75, %76 : vector<2x8x128xf32>
    %78 = arith.addf %69, %77 : vector<2x8x128xf32>
    %79 = vector.extract_strided_slice %4 {offsets = [0, 4, 0], sizes = [2, 1, 128], strides = [1, 1, 1]} : vector<2x8x128xf32> to vector<2x1x128xf32>
    %c4 = arith.constant 4 : index
    %c0_25 = arith.constant 0 : index
    %c0_26 = arith.constant 0 : index
    %80 = vector.load %arg3[%c4, %c0_25, %c0_26] : memref<8x8x128xbf16, #tpu.memory_space<vmem>>, vector<1x8x128xbf16>
    %81 = vector.shape_cast %80 : vector<1x8x128xbf16> to vector<8x128xbf16>
    %82 = vector.shape_cast %81 : vector<8x128xbf16> to vector<1x8x128xbf16>
    %83 = arith.extf %82 : vector<1x8x128xbf16> to vector<1x8x128xf32>
    %84 = vector.broadcast %79 : vector<2x1x128xf32> to vector<2x8x128xf32>
    %85 = vector.broadcast %83 : vector<1x8x128xf32> to vector<2x8x128xf32>
    %86 = arith.mulf %84, %85 : vector<2x8x128xf32>
    %87 = arith.addf %78, %86 : vector<2x8x128xf32>
    %88 = vector.extract_strided_slice %5 {offsets = [0, 4, 0], sizes = [2, 1, 128], strides = [1, 1, 1]} : vector<2x8x128xf32> to vector<2x1x128xf32>
    %c4_27 = arith.constant 4 : index
    %c0_28 = arith.constant 0 : index
    %c0_29 = arith.constant 0 : index
    %89 = vector.load %arg4[%c4_27, %c0_28, %c0_29] : memref<8x8x128xbf16, #tpu.memory_space<vmem>>, vector<1x8x128xbf16>
    %90 = vector.shape_cast %89 : vector<1x8x128xbf16> to vector<8x128xbf16>
    %91 = vector.shape_cast %90 : vector<8x128xbf16> to vector<1x8x128xbf16>
    %92 = arith.extf %91 : vector<1x8x128xbf16> to vector<1x8x128xf32>
    %93 = vector.broadcast %88 : vector<2x1x128xf32> to vector<2x8x128xf32>
    %94 = vector.broadcast %92 : vector<1x8x128xf32> to vector<2x8x128xf32>
    %95 = arith.mulf %93, %94 : vector<2x8x128xf32>
    %96 = arith.addf %87, %95 : vector<2x8x128xf32>
    %97 = vector.extract_strided_slice %4 {offsets = [0, 5, 0], sizes = [2, 1, 128], strides = [1, 1, 1]} : vector<2x8x128xf32> to vector<2x1x128xf32>
    %c5 = arith.constant 5 : index
    %c0_30 = arith.constant 0 : index
    %c0_31 = arith.constant 0 : index
    %98 = vector.load %arg3[%c5, %c0_30, %c0_31] : memref<8x8x128xbf16, #tpu.memory_space<vmem>>, vector<1x8x128xbf16>
    %99 = vector.shape_cast %98 : vector<1x8x128xbf16> to vector<8x128xbf16>
    %100 = vector.shape_cast %99 : vector<8x128xbf16> to vector<1x8x128xbf16>
    %101 = arith.extf %100 : vector<1x8x128xbf16> to vector<1x8x128xf32>
    %102 = vector.broadcast %97 : vector<2x1x128xf32> to vector<2x8x128xf32>
    %103 = vector.broadcast %101 : vector<1x8x128xf32> to vector<2x8x128xf32>
    %104 = arith.mulf %102, %103 : vector<2x8x128xf32>
    %105 = arith.addf %96, %104 : vector<2x8x128xf32>
    %106 = vector.extract_strided_slice %5 {offsets = [0, 5, 0], sizes = [2, 1, 128], strides = [1, 1, 1]} : vector<2x8x128xf32> to vector<2x1x128xf32>
    %c5_32 = arith.constant 5 : index
    %c0_33 = arith.constant 0 : index
    %c0_34 = arith.constant 0 : index
    %107 = vector.load %arg4[%c5_32, %c0_33, %c0_34] : memref<8x8x128xbf16, #tpu.memory_space<vmem>>, vector<1x8x128xbf16>
    %108 = vector.shape_cast %107 : vector<1x8x128xbf16> to vector<8x128xbf16>
    %109 = vector.shape_cast %108 : vector<8x128xbf16> to vector<1x8x128xbf16>
    %110 = arith.extf %109 : vector<1x8x128xbf16> to vector<1x8x128xf32>
    %111 = vector.broadcast %106 : vector<2x1x128xf32> to vector<2x8x128xf32>
    %112 = vector.broadcast %110 : vector<1x8x128xf32> to vector<2x8x128xf32>
    %113 = arith.mulf %111, %112 : vector<2x8x128xf32>
    %114 = arith.addf %105, %113 : vector<2x8x128xf32>
    %115 = vector.extract_strided_slice %4 {offsets = [0, 6, 0], sizes = [2, 1, 128], strides = [1, 1, 1]} : vector<2x8x128xf32> to vector<2x1x128xf32>
    %c6 = arith.constant 6 : index
    %c0_35 = arith.constant 0 : index
    %c0_36 = arith.constant 0 : index
    %116 = vector.load %arg3[%c6, %c0_35, %c0_36] : memref<8x8x128xbf16, #tpu.memory_space<vmem>>, vector<1x8x128xbf16>
    %117 = vector.shape_cast %116 : vector<1x8x128xbf16> to vector<8x128xbf16>
    %118 = vector.shape_cast %117 : vector<8x128xbf16> to vector<1x8x128xbf16>
    %119 = arith.extf %118 : vector<1x8x128xbf16> to vector<1x8x128xf32>
    %120 = vector.broadcast %115 : vector<2x1x128xf32> to vector<2x8x128xf32>
    %121 = vector.broadcast %119 : vector<1x8x128xf32> to vector<2x8x128xf32>
    %122 = arith.mulf %120, %121 : vector<2x8x128xf32>
    %123 = arith.addf %114, %122 : vector<2x8x128xf32>
    %124 = vector.extract_strided_slice %5 {offsets = [0, 6, 0], sizes = [2, 1, 128], strides = [1, 1, 1]} : vector<2x8x128xf32> to vector<2x1x128xf32>
    %c6_37 = arith.constant 6 : index
    %c0_38 = arith.constant 0 : index
    %c0_39 = arith.constant 0 : index
    %125 = vector.load %arg4[%c6_37, %c0_38, %c0_39] : memref<8x8x128xbf16, #tpu.memory_space<vmem>>, vector<1x8x128xbf16>
    %126 = vector.shape_cast %125 : vector<1x8x128xbf16> to vector<8x128xbf16>
    %127 = vector.shape_cast %126 : vector<8x128xbf16> to vector<1x8x128xbf16>
    %128 = arith.extf %127 : vector<1x8x128xbf16> to vector<1x8x128xf32>
    %129 = vector.broadcast %124 : vector<2x1x128xf32> to vector<2x8x128xf32>
    %130 = vector.broadcast %128 : vector<1x8x128xf32> to vector<2x8x128xf32>
    %131 = arith.mulf %129, %130 : vector<2x8x128xf32>
    %132 = arith.addf %123, %131 : vector<2x8x128xf32>
    %133 = vector.extract_strided_slice %4 {offsets = [0, 7, 0], sizes = [2, 1, 128], strides = [1, 1, 1]} : vector<2x8x128xf32> to vector<2x1x128xf32>
    %c7 = arith.constant 7 : index
    %c0_40 = arith.constant 0 : index
    %c0_41 = arith.constant 0 : index
    %134 = vector.load %arg3[%c7, %c0_40, %c0_41] : memref<8x8x128xbf16, #tpu.memory_space<vmem>>, vector<1x8x128xbf16>
    %135 = vector.shape_cast %134 : vector<1x8x128xbf16> to vector<8x128xbf16>
    %136 = vector.shape_cast %135 : vector<8x128xbf16> to vector<1x8x128xbf16>
    %137 = arith.extf %136 : vector<1x8x128xbf16> to vector<1x8x128xf32>
    %138 = vector.broadcast %133 : vector<2x1x128xf32> to vector<2x8x128xf32>
    %139 = vector.broadcast %137 : vector<1x8x128xf32> to vector<2x8x128xf32>
    %140 = arith.mulf %138, %139 : vector<2x8x128xf32>
    %141 = arith.addf %132, %140 : vector<2x8x128xf32>
    %142 = vector.extract_strided_slice %5 {offsets = [0, 7, 0], sizes = [2, 1, 128], strides = [1, 1, 1]} : vector<2x8x128xf32> to vector<2x1x128xf32>
    %c7_42 = arith.constant 7 : index
    %c0_43 = arith.constant 0 : index
    %c0_44 = arith.constant 0 : index
    %143 = vector.load %arg4[%c7_42, %c0_43, %c0_44] : memref<8x8x128xbf16, #tpu.memory_space<vmem>>, vector<1x8x128xbf16>
    %144 = vector.shape_cast %143 : vector<1x8x128xbf16> to vector<8x128xbf16>
    %145 = vector.shape_cast %144 : vector<8x128xbf16> to vector<1x8x128xbf16>
    %146 = arith.extf %145 : vector<1x8x128xbf16> to vector<1x8x128xf32>
    %147 = vector.broadcast %142 : vector<2x1x128xf32> to vector<2x8x128xf32>
    %148 = vector.broadcast %146 : vector<1x8x128xf32> to vector<2x8x128xf32>
    %149 = arith.mulf %147, %148 : vector<2x8x128xf32>
    %150 = arith.addf %141, %149 : vector<2x8x128xf32>
    %151 = vector.shape_cast %150 : vector<2x8x128xf32> to vector<16x128xf32>
    %152 = arith.truncf %151 : vector<16x128xf32> to vector<16x128xbf16>
    %c0_45 = arith.constant 0 : index
    %c0_46 = arith.constant 0 : index
    %153 = vector.load %arg5[%c0_45, %c0_46] : memref<128x16xbf16, #tpu.memory_space<vmem>>, vector<128x16xbf16>
    %cst_47 = arith.constant dense<0.000000e+00> : vector<16x16xf32>
    %154 = tpu.matmul %152, %153, %cst_47 {dimension_numbers = #tpu.dot_dimension_numbers<[1], [0], [0], [1], [0, 0, 1, 1], [], []>} : vector<16x128xbf16>, vector<128x16xbf16>, vector<16x16xf32> -> vector<16x16xf32>
    %c0_48 = arith.constant 0 : index
    %c0_49 = arith.constant 0 : index
    %155 = vector.load %arg6[%c0_48, %c0_49] : memref<16x16xf32, #tpu.memory_space<vmem>>, vector<16x16xf32>
    tpu.vector_store %arg6[%c0_48, %c0_49], %154 {strides = array<i32>} : memref<16x16xf32, #tpu.memory_space<vmem>>, vector<16x16xf32>,
    return
  }
  func.func @transform_0(%arg0: i32) -> (i32, i32) {
    %c0_i32 = arith.constant 0 : i32
    %c0_i32_0 = arith.constant 0 : i32
    return %arg0, %c0_i32 : i32, i32
  }
  func.func @transform_1(%arg0: i32) -> (i32, i32) {
    %c0_i32 = arith.constant 0 : i32
    %c0_i32_0 = arith.constant 0 : i32
    %c0_i32_1 = arith.constant 0 : i32
    return %c0_i32, %c0_i32_0 : i32, i32
  }
  func.func @transform_2(%arg0: i32) -> (i32, i32, i32) {
    %c0_i32 = arith.constant 0 : i32
    %c0_i32_0 = arith.constant 0 : i32
    %c0_i32_1 = arith.constant 0 : i32
    %c0_i32_2 = arith.constant 0 : i32
    return %c0_i32, %c0_i32_0, %c0_i32_1 : i32, i32, i32
  }
  func.func @transform_3(%arg0: i32) -> (i32, i32, i32) {
    %c0_i32 = arith.constant 0 : i32
    %c0_i32_0 = arith.constant 0 : i32
    %c0_i32_1 = arith.constant 0 : i32
    %c0_i32_2 = arith.constant 0 : i32
    return %c0_i32, %c0_i32_0, %c0_i32_1 : i32, i32, i32
  }
  func.func @transform_4(%arg0: i32) -> (i32, i32) {
    %c0_i32 = arith.constant 0 : i32
    %c0_i32_0 = arith.constant 0 : i32
    %c0_i32_1 = arith.constant 0 : i32
    return %c0_i32, %c0_i32_0 : i32, i32
  }
  func.func @transform_5(%arg0: i32) -> (i32, i32) {
    %c0_i32 = arith.constant 0 : i32
    %c0_i32_0 = arith.constant 0 : i32
    return %arg0, %c0_i32 : i32, i32
  }
}

module attributes {stable_mosaic.version = 11 : i64} {
  func.func @_spectral_conv1d_kernel(%arg0: i32, %arg1: memref<16x16xbf16, #tpu.memory_space<vmem>>, %arg2: memref<16x128xbf16, #tpu.memory_space<vmem>>, %arg3: memref<8x8x128xbf16, #tpu.memory_space<vmem>>, %arg4: memref<8x8x128xbf16, #tpu.memory_space<vmem>>, %arg5: memref<128x16xbf16, #tpu.memory_space<vmem>>, %arg6: memref<16x16xf32, #tpu.memory_space<vmem>>) attributes {dimension_semantics = [#tpu.dimension_semantics<parallel>], iteration_bounds = array<i64: 2>, scalar_prefetch = 0 : i64, scratch_operands = 0 : i64, tpu.core_type = #tpu.core_type<tc>, window_params = [{transform_indices = @transform_0, window_bounds = array<i64: 16, 16>}, {pipeline_mode = #tpu.pipeline_mode<synchronous>, transform_indices = @transform_1, window_bounds = array<i64: 16, 128>}, {pipeline_mode = #tpu.pipeline_mode<synchronous>, transform_indices = @transform_2, window_bounds = array<i64: 8, 8, 128>}, {pipeline_mode = #tpu.pipeline_mode<synchronous>, transform_indices = @transform_3, window_bounds = array<i64: 8, 8, 128>}, {pipeline_mode = #tpu.pipeline_mode<synchronous>, transform_indices = @transform_4, window_bounds = array<i64: 128, 16>}, {transform_indices = @transform_5, window_bounds = array<i64: 16, 16>}]} {
    %c0 = arith.constant 0 : index
    %c0_0 = arith.constant 0 : index
    %0 = vector.load %arg1[%c0, %c0_0] : memref<16x16xbf16, #tpu.memory_space<vmem>>, vector<16x16xbf16>
    %c0_1 = arith.constant 0 : index
    %c0_2 = arith.constant 0 : index
    %1 = vector.load %arg2[%c0_1, %c0_2] : memref<16x128xbf16, #tpu.memory_space<vmem>>, vector<16x128xbf16>
    %cst = arith.constant dense<0.000000e+00> : vector<16x128xf32>
    %2 = tpu.matmul %0, %1, %cst {dimension_numbers = #tpu.dot_dimension_numbers<[1], [0], [0], [1], [0, 0, 1, 1], [], []>} : vector<16x16xbf16>, vector<16x128xbf16>, vector<16x128xf32> -> vector<16x128xf32>
    %c64_i32 = arith.constant 64 : i32
    %3 = tpu.dynamic_rotate %2 by %c64_i32 dim 1 : vector<16x128xf32>, i32 -> vector<16x128xf32>
    %4 = vector.shape_cast %2 : vector<16x128xf32> to vector<2x8x128xf32>
    %5 = vector.shape_cast %3 : vector<16x128xf32> to vector<2x8x128xf32>
    %cst_3 = arith.constant 0.000000e+00 : f32
    %6 = vector.broadcast %cst_3 : f32 to vector<2x8x128xf32>
    %7 = vector.extract_strided_slice %4 {offsets = [0, 0, 0], sizes = [2, 1, 128], strides = [1, 1, 1]} : vector<2x8x128xf32> to vector<2x1x128xf32>
    %c0_4 = arith.constant 0 : index
    %c0_5 = arith.constant 0 : index
    %c0_6 = arith.constant 0 : index
    %8 = vector.load %arg3[%c0_4, %c0_5, %c0_6] : memref<8x8x128xbf16, #tpu.memory_space<vmem>>, vector<1x8x128xbf16>
    %9 = vector.shape_cast %8 : vector<1x8x128xbf16> to vector<8x128xbf16>
    %10 = vector.shape_cast %9 : vector<8x128xbf16> to vector<1x8x128xbf16>
    %11 = arith.extf %10 : vector<1x8x128xbf16> to vector<1x8x128xf32>
    %12 = vector.broadcast %7 : vector<2x1x128xf32> to vector<2x8x128xf32>
    %13 = vector.broadcast %11 : vector<1x8x128xf32> to vector<2x8x128xf32>
    %14 = arith.mulf %12, %13 : vector<2x8x128xf32>
    %15 = arith.addf %6, %14 : vector<2x8x128xf32>
    %16 = vector.extract_strided_slice %5 {offsets = [0, 0, 0], sizes = [2, 1, 128], strides = [1, 1, 1]} : vector<2x8x128xf32> to vector<2x1x128xf32>
    %c0_7 = arith.constant 0 : index
    %c0_8 = arith.constant 0 : index
    %c0_9 = arith.constant 0 : index
    %17 = vector.load %arg4[%c0_7, %c0_8, %c0_9] : memref<8x8x128xbf16, #tpu.memory_space<vmem>>, vector<1x8x128xbf16>
    %18 = vector.shape_cast %17 : vector<1x8x128xbf16> to vector<8x128xbf16>
    %19 = vector.shape_cast %18 : vector<8x128xbf16> to vector<1x8x128xbf16>
    %20 = arith.extf %19 : vector<1x8x128xbf16> to vector<1x8x128xf32>
    %21 = vector.broadcast %16 : vector<2x1x128xf32> to vector<2x8x128xf32>
    %22 = vector.broadcast %20 : vector<1x8x128xf32> to vector<2x8x128xf32>
    %23 = arith.mulf %21, %22 : vector<2x8x128xf32>
    %24 = arith.addf %15, %23 : vector<2x8x128xf32>
    %25 = vector.extract_strided_slice %4 {offsets = [0, 1, 0], sizes = [2, 1, 128], strides = [1, 1, 1]} : vector<2x8x128xf32> to vector<2x1x128xf32>
    %c1 = arith.constant 1 : index
    %c0_10 = arith.constant 0 : index
    %c0_11 = arith.constant 0 : index
    %26 = vector.load %arg3[%c1, %c0_10, %c0_11] : memref<8x8x128xbf16, #tpu.memory_space<vmem>>, vector<1x8x128xbf16>
    %27 = vector.shape_cast %26 : vector<1x8x128xbf16> to vector<8x128xbf16>
    %28 = vector.shape_cast %27 : vector<8x128xbf16> to vector<1x8x128xbf16>
    %29 = arith.extf %28 : vector<1x8x128xbf16> to vector<1x8x128xf32>
    %30 = vector.broadcast %25 : vector<2x1x128xf32> to vector<2x8x128xf32>
    %31 = vector.broadcast %29 : vector<1x8x128xf32> to vector<2x8x128xf32>
    %32 = arith.mulf %30, %31 : vector<2x8x128xf32>
    %33 = arith.addf %24, %32 : vector<2x8x128xf32>
    %34 = vector.extract_strided_slice %5 {offsets = [0, 1, 0], sizes = [2, 1, 128], strides = [1, 1, 1]} : vector<2x8x128xf32> to vector<2x1x128xf32>
    %c1_12 = arith.constant 1 : index
    %c0_13 = arith.constant 0 : index
    %c0_14 = arith.constant 0 : index
    %35 = vector.load %arg4[%c1_12, %c0_13, %c0_14] : memref<8x8x128xbf16, #tpu.memory_space<vmem>>, vector<1x8x128xbf16>
    %36 = vector.shape_cast %35 : vector<1x8x128xbf16> to vector<8x128xbf16>
    %37 = vector.shape_cast %36 : vector<8x128xbf16> to vector<1x8x128xbf16>
    %38 = arith.extf %37 : vector<1x8x128xbf16> to vector<1x8x128xf32>
    %39 = vector.broadcast %34 : vector<2x1x128xf32> to vector<2x8x128xf32>
    %40 = vector.broadcast %38 : vector<1x8x128xf32> to vector<2x8x128xf32>
    %41 = arith.mulf %39, %40 : vector<2x8x128xf32>
    %42 = arith.addf %33, %41 : vector<2x8x128xf32>
    %43 = vector.extract_strided_slice %4 {offsets = [0, 2, 0], sizes = [2, 1, 128], strides = [1, 1, 1]} : vector<2x8x128xf32> to vector<2x1x128xf32>
    %c2 = arith.constant 2 : index
    %c0_15 = arith.constant 0 : index
    %c0_16 = arith.constant 0 : index
    %44 = vector.load %arg3[%c2, %c0_15, %c0_16] : memref<8x8x128xbf16, #tpu.memory_space<vmem>>, vector<1x8x128xbf16>
    %45 = vector.shape_cast %44 : vector<1x8x128xbf16> to vector<8x128xbf16>
    %46 = vector.shape_cast %45 : vector<8x128xbf16> to vector<1x8x128xbf16>
    %47 = arith.extf %46 : vector<1x8x128xbf16> to vector<1x8x128xf32>
    %48 = vector.broadcast %43 : vector<2x1x128xf32> to vector<2x8x128xf32>
    %49 = vector.broadcast %47 : vector<1x8x128xf32> to vector<2x8x128xf32>
    %50 = arith.mulf %48, %49 : vector<2x8x128xf32>
    %51 = arith.addf %42, %50 : vector<2x8x128xf32>
    %52 = vector.extract_strided_slice %5 {offsets = [0, 2, 0], sizes = [2, 1, 128], strides = [1, 1, 1]} : vector<2x8x128xf32> to vector<2x1x128xf32>
    %c2_17 = arith.constant 2 : index
    %c0_18 = arith.constant 0 : index
    %c0_19 = arith.constant 0 : index
    %53 = vector.load %arg4[%c2_17, %c0_18, %c0_19] : memref<8x8x128xbf16, #tpu.memory_space<vmem>>, vector<1x8x128xbf16>
    %54 = vector.shape_cast %53 : vector<1x8x128xbf16> to vector<8x128xbf16>
    %55 = vector.shape_cast %54 : vector<8x128xbf16> to vector<1x8x128xbf16>
    %56 = arith.extf %55 : vector<1x8x128xbf16> to vector<1x8x128xf32>
    %57 = vector.broadcast %52 : vector<2x1x128xf32> to vector<2x8x128xf32>
    %58 = vector.broadcast %56 : vector<1x8x128xf32> to vector<2x8x128xf32>
    %59 = arith.mulf %57, %58 : vector<2x8x128xf32>
    %60 = arith.addf %51, %59 : vector<2x8x128xf32>
    %61 = vector.extract_strided_slice %4 {offsets = [0, 3, 0], sizes = [2, 1, 128], strides = [1, 1, 1]} : vector<2x8x128xf32> to vector<2x1x128xf32>
    %c3 = arith.constant 3 : index
    %c0_20 = arith.constant 0 : index
    %c0_21 = arith.constant 0 : index
    %62 = vector.load %arg3[%c3, %c0_20, %c0_21] : memref<8x8x128xbf16, #tpu.memory_space<vmem>>, vector<1x8x128xbf16>
    %63 = vector.shape_cast %62 : vector<1x8x128xbf16> to vector<8x128xbf16>
    %64 = vector.shape_cast %63 : vector<8x128xbf16> to vector<1x8x128xbf16>
    %65 = arith.extf %64 : vector<1x8x128xbf16> to vector<1x8x128xf32>
    %66 = vector.broadcast %61 : vector<2x1x128xf32> to vector<2x8x128xf32>
    %67 = vector.broadcast %65 : vector<1x8x128xf32> to vector<2x8x128xf32>
    %68 = arith.mulf %66, %67 : vector<2x8x128xf32>
    %69 = arith.addf %60, %68 : vector<2x8x128xf32>
    %70 = vector.extract_strided_slice %5 {offsets = [0, 3, 0], sizes = [2, 1, 128], strides = [1, 1, 1]} : vector<2x8x128xf32> to vector<2x1x128xf32>
    %c3_22 = arith.constant 3 : index
    %c0_23 = arith.constant 0 : index
    %c0_24 = arith.constant 0 : index
    %71 = vector.load %arg4[%c3_22, %c0_23, %c0_24] : memref<8x8x128xbf16, #tpu.memory_space<vmem>>, vector<1x8x128xbf16>
    %72 = vector.shape_cast %71 : vector<1x8x128xbf16> to vector<8x128xbf16>
    %73 = vector.shape_cast %72 : vector<8x128xbf16> to vector<1x8x128xbf16>
    %74 = arith.extf %73 : vector<1x8x128xbf16> to vector<1x8x128xf32>
    %75 = vector.broadcast %70 : vector<2x1x128xf32> to vector<2x8x128xf32>
    %76 = vector.broadcast %74 : vector<1x8x128xf32> to vector<2x8x128xf32>
    %77 = arith.mulf %75, %76 : vector<2x8x128xf32>
    %78 = arith.addf %69, %77 : vector<2x8x128xf32>
    %79 = vector.extract_strided_slice %4 {offsets = [0, 4, 0], sizes = [2, 1, 128], strides = [1, 1, 1]} : vector<2x8x128xf32> to vector<2x1x128xf32>
    %c4 = arith.constant 4 : index
    %c0_25 = arith.constant 0 : index
    %c0_26 = arith.constant 0 : index
    %80 = vector.load %arg3[%c4, %c0_25, %c0_26] : memref<8x8x128xbf16, #tpu.memory_space<vmem>>, vector<1x8x128xbf16>
    %81 = vector.shape_cast %80 : vector<1x8x128xbf16> to vector<8x128xbf16>
    %82 = vector.shape_cast %81 : vector<8x128xbf16> to vector<1x8x128xbf16>
    %83 = arith.extf %82 : vector<1x8x128xbf16> to vector<1x8x128xf32>
    %84 = vector.broadcast %79 : vector<2x1x128xf32> to vector<2x8x128xf32>
    %85 = vector.broadcast %83 : vector<1x8x128xf32> to vector<2x8x128xf32>
    %86 = arith.mulf %84, %85 : vector<2x8x128xf32>
    %87 = arith.addf %78, %86 : vector<2x8x128xf32>
    %88 = vector.extract_strided_slice %5 {offsets = [0, 4, 0], sizes = [2, 1, 128], strides = [1, 1, 1]} : vector<2x8x128xf32> to vector<2x1x128xf32>
    %c4_27 = arith.constant 4 : index
    %c0_28 = arith.constant 0 : index
    %c0_29 = arith.constant 0 : index
    %89 = vector.load %arg4[%c4_27, %c0_28, %c0_29] : memref<8x8x128xbf16, #tpu.memory_space<vmem>>, vector<1x8x128xbf16>
    %90 = vector.shape_cast %89 : vector<1x8x128xbf16> to vector<8x128xbf16>
    %91 = vector.shape_cast %90 : vector<8x128xbf16> to vector<1x8x128xbf16>
    %92 = arith.extf %91 : vector<1x8x128xbf16> to vector<1x8x128xf32>
    %93 = vector.broadcast %88 : vector<2x1x128xf32> to vector<2x8x128xf32>
    %94 = vector.broadcast %92 : vector<1x8x128xf32> to vector<2x8x128xf32>
    %95 = arith.mulf %93, %94 : vector<2x8x128xf32>
    %96 = arith.addf %87, %95 : vector<2x8x128xf32>
    %97 = vector.extract_strided_slice %4 {offsets = [0, 5, 0], sizes = [2, 1, 128], strides = [1, 1, 1]} : vector<2x8x128xf32> to vector<2x1x128xf32>
    %c5 = arith.constant 5 : index
    %c0_30 = arith.constant 0 : index
    %c0_31 = arith.constant 0 : index
    %98 = vector.load %arg3[%c5, %c0_30, %c0_31] : memref<8x8x128xbf16, #tpu.memory_space<vmem>>, vector<1x8x128xbf16>
    %99 = vector.shape_cast %98 : vector<1x8x128xbf16> to vector<8x128xbf16>
    %100 = vector.shape_cast %99 : vector<8x128xbf16> to vector<1x8x128xbf16>
    %101 = arith.extf %100 : vector<1x8x128xbf16> to vector<1x8x128xf32>
    %102 = vector.broadcast %97 : vector<2x1x128xf32> to vector<2x8x128xf32>
    %103 = vector.broadcast %101 : vector<1x8x128xf32> to vector<2x8x128xf32>
    %104 = arith.mulf %102, %103 : vector<2x8x128xf32>
    %105 = arith.addf %96, %104 : vector<2x8x128xf32>
    %106 = vector.extract_strided_slice %5 {offsets = [0, 5, 0], sizes = [2, 1, 128], strides = [1, 1, 1]} : vector<2x8x128xf32> to vector<2x1x128xf32>
    %c5_32 = arith.constant 5 : index
    %c0_33 = arith.constant 0 : index
    %c0_34 = arith.constant 0 : index
    %107 = vector.load %arg4[%c5_32, %c0_33, %c0_34] : memref<8x8x128xbf16, #tpu.memory_space<vmem>>, vector<1x8x128xbf16>
    %108 = vector.shape_cast %107 : vector<1x8x128xbf16> to vector<8x128xbf16>
    %109 = vector.shape_cast %108 : vector<8x128xbf16> to vector<1x8x128xbf16>
    %110 = arith.extf %109 : vector<1x8x128xbf16> to vector<1x8x128xf32>
    %111 = vector.broadcast %106 : vector<2x1x128xf32> to vector<2x8x128xf32>
    %112 = vector.broadcast %110 : vector<1x8x128xf32> to vector<2x8x128xf32>
    %113 = arith.mulf %111, %112 : vector<2x8x128xf32>
    %114 = arith.addf %105, %113 : vector<2x8x128xf32>
    %115 = vector.extract_strided_slice %4 {offsets = [0, 6, 0], sizes = [2, 1, 128], strides = [1, 1, 1]} : vector<2x8x128xf32> to vector<2x1x128xf32>
    %c6 = arith.constant 6 : index
    %c0_35 = arith.constant 0 : index
    %c0_36 = arith.constant 0 : index
    %116 = vector.load %arg3[%c6, %c0_35, %c0_36] : memref<8x8x128xbf16, #tpu.memory_space<vmem>>, vector<1x8x128xbf16>
    %117 = vector.shape_cast %116 : vector<1x8x128xbf16> to vector<8x128xbf16>
    %118 = vector.shape_cast %117 : vector<8x128xbf16> to vector<1x8x128xbf16>
    %119 = arith.extf %118 : vector<1x8x128xbf16> to vector<1x8x128xf32>
    %120 = vector.broadcast %115 : vector<2x1x128xf32> to vector<2x8x128xf32>
    %121 = vector.broadcast %119 : vector<1x8x128xf32> to vector<2x8x128xf32>
    %122 = arith.mulf %120, %121 : vector<2x8x128xf32>
    %123 = arith.addf %114, %122 : vector<2x8x128xf32>
    %124 = vector.extract_strided_slice %5 {offsets = [0, 6, 0], sizes = [2, 1, 128], strides = [1, 1, 1]} : vector<2x8x128xf32> to vector<2x1x128xf32>
    %c6_37 = arith.constant 6 : index
    %c0_38 = arith.constant 0 : index
    %c0_39 = arith.constant 0 : index
    %125 = vector.load %arg4[%c6_37, %c0_38, %c0_39] : memref<8x8x128xbf16, #tpu.memory_space<vmem>>, vector<1x8x128xbf16>
    %126 = vector.shape_cast %125 : vector<1x8x128xbf16> to vector<8x128xbf16>
    %127 = vector.shape_cast %126 : vector<8x128xbf16> to vector<1x8x128xbf16>
    %128 = arith.extf %127 : vector<1x8x128xbf16> to vector<1x8x128xf32>
    %129 = vector.broadcast %124 : vector<2x1x128xf32> to vector<2x8x128xf32>
    %130 = vector.broadcast %128 : vector<1x8x128xf32> to vector<2x8x128xf32>
    %131 = arith.mulf %129, %130 : vector<2x8x128xf32>
    %132 = arith.addf %123, %131 : vector<2x8x128xf32>
    %133 = vector.extract_strided_slice %4 {offsets = [0, 7, 0], sizes = [2, 1, 128], strides = [1, 1, 1]} : vector<2x8x128xf32> to vector<2x1x128xf32>
    %c7 = arith.constant 7 : index
    %c0_40 = arith.constant 0 : index
    %c0_41 = arith.constant 0 : index
    %134 = vector.load %arg3[%c7, %c0_40, %c0_41] : memref<8x8x128xbf16, #tpu.memory_space<vmem>>, vector<1x8x128xbf16>
    %135 = vector.shape_cast %134 : vector<1x8x128xbf16> to vector<8x128xbf16>
    %136 = vector.shape_cast %135 : vector<8x128xbf16> to vector<1x8x128xbf16>
    %137 = arith.extf %136 : vector<1x8x128xbf16> to vector<1x8x128xf32>
    %138 = vector.broadcast %133 : vector<2x1x128xf32> to vector<2x8x128xf32>
    %139 = vector.broadcast %137 : vector<1x8x128xf32> to vector<2x8x128xf32>
    %140 = arith.mulf %138, %139 : vector<2x8x128xf32>
    %141 = arith.addf %132, %140 : vector<2x8x128xf32>
    %142 = vector.extract_strided_slice %5 {offsets = [0, 7, 0], sizes = [2, 1, 128], strides = [1, 1, 1]} : vector<2x8x128xf32> to vector<2x1x128xf32>
    %c7_42 = arith.constant 7 : index
    %c0_43 = arith.constant 0 : index
    %c0_44 = arith.constant 0 : index
    %143 = vector.load %arg4[%c7_42, %c0_43, %c0_44] : memref<8x8x128xbf16, #tpu.memory_space<vmem>>, vector<1x8x128xbf16>
    %144 = vector.shape_cast %143 : vector<1x8x128xbf16> to vector<8x128xbf16>
    %145 = vector.shape_cast %144 : vector<8x128xbf16> to vector<1x8x128xbf16>
    %146 = arith.extf %145 : vector<1x8x128xbf16> to vector<1x8x128xf32>
    %147 = vector.broadcast %142 : vector<2x1x128xf32> to vector<2x8x128xf32>
    %148 = vector.broadcast %146 : vector<1x8x128xf32> to vector<2x8x128xf32>
    %149 = arith.mulf %147, %148 : vector<2x8x128xf32>
    %150 = arith.addf %141, %149 : vector<2x8x128xf32>
    %151 = vector.shape_cast %150 : vector<2x8x128xf32> to vector<16x128xf32>
    %152 = arith.truncf %151 : vector<16x128xf32> to vector<16x128xbf16>
    %c0_45 = arith.constant 0 : index
    %c0_46 = arith.constant 0 : index
    %153 = vector.load %arg5[%c0_45, %c0_46] : memref<128x16xbf16, #tpu.memory_space<vmem>>, vector<128x16xbf16>
    %cst_47 = arith.constant dense<0.000000e+00> : vector<16x16xf32>
    %154 = tpu.matmul %152, %153, %cst_47 {dimension_numbers = #tpu.dot_dimension_numbers<[1], [0], [0], [1], [0, 0, 1, 1], [], []>} : vector<16x128xbf16>, vector<128x16xbf16>, vector<16x16xf32> -> vector<16x16xf32>
    %c0_48 = arith.constant 0 : index
    %c0_49 = arith.constant 0 : index
    %155 = vector.load %arg6[%c0_48, %c0_49] : memref<16x16xf32, #tpu.memory_space<vmem>>, vector<16x16xf32>
    tpu.vector_store %arg6[%c0_48, %c0_49], %154 {strides = array<i32>} : memref<16x16xf32, #tpu.memory_space<vmem>>, vector<16x16xf32>,
    return
  }
  func.func @transform_0(%arg0: i32) -> (i32, i32) {
    %c0_i32 = arith.constant 0 : i32
    %c0_i32_0 = arith.constant 0 : i32
    return %arg0, %c0_i32 : i32, i32
  }
  func.func @transform_1(%arg0: i32) -> (i32, i32) {
    %c0_i32 = arith.constant 0 : i32
    %c0_i32_0 = arith.constant 0 : i32
    %c0_i32_1 = arith.constant 0 : i32
    return %c0_i32, %c0_i32_0 : i32, i32
  }
  func.func @transform_2(%arg0: i32) -> (i32, i32, i32) {
    %c0_i32 = arith.constant 0 : i32
    %c0_i32_0 = arith.constant 0 : i32
    %c0_i32_1 = arith.constant 0 : i32
    %c0_i32_2 = arith.constant 0 : i32
    return %c0_i32, %c0_i32_0, %c0_i32_1 : i32, i32, i32
  }
  func.func @transform_3(%arg0: i32) -> (i32, i32, i32) {
    %c0_i32 = arith.constant 0 : i32
    %c0_i32_0 = arith.constant 0 : i32
    %c0_i32_1 = arith.constant 0 : i32
    %c0_i32_2 = arith.constant 0 : i32
    return %c0_i32, %c0_i32_0, %c0_i32_1 : i32, i32, i32
  }
  func.func @transform_4(%arg0: i32) -> (i32, i32) {
    %c0_i32 = arith.constant 0 : i32
    %c0_i32_0 = arith.constant 0 : i32
    %c0_i32_1 = arith.constant 0 : i32
    return %c0_i32, %c0_i32_0 : i32, i32
  }
  func.func @transform_5(%arg0: i32) -> (i32, i32) {
    %c0_i32 = arith.constant 0 : i32
    %c0_i32_0 = arith.constant 0 : i32
    return %arg0, %c0_i32 : i32, i32
  }
}

</mosaic_0001>

<llo_original>
// kernel: tpu_custom_call.1
$region0: #{tpu_custom_call.1}
  #allocation0 [shape = 'u32[]', space=smem, size = 0x4, offset = 0x4, fixed_abs, tag = 'smem constant byte address 0x4 - core index']
  #allocation1 [shape = 'u32[144,128]{1,0:T(1,128)}', space=vmem, size = 0x12000, scoped, tag = 'internal scratch']
  %s0 = inlined_call_operand.vmem [shape: bf16[32,16], index: 0, kind: input, shape index: {}]
  %s1 = inlined_call_operand.vmem [shape: bf16[16,128], index: 1, kind: input, shape index: {}]
  %s2 = inlined_call_operand.vmem [shape: bf16[8,8,128], index: 2, kind: input, shape index: {}]
  %s3 = inlined_call_operand.vmem [shape: bf16[8,8,128], index: 3, kind: input, shape index: {}]
  %s4 = inlined_call_operand.vmem [shape: bf16[128,16], index: 4, kind: input, shape index: {}]
  %s5 = inlined_call_operand.vmem [shape: f32[32,16], index: 5, kind: output, shape index: {}]
  %s6 = sld [smem:[#allocation0]]
  $region53: #{tpu_custom_call.1} parent=0
    _
  %s8 = ssub.s32 1, %s6
  %s9 = scalar_select 0, %s8, %s6
  loop: start=0, step=1, limit=4
  $region2: #{tpu_custom_call.1} parent=0 // loop_pre_header
    _
  $region3: #{tpu_custom_call.1} parent=0 // loop_header
    %s11 = sphi 0, %s15
    %p12 = scmp.ge.s32.totalorder %s11, 4
    %s21 = sphi 0, %s23
    %s24 = sphi 0, %s21
    %s25 = sphi 0, %s24
    %s41 = sphi 0, %s25
    %s45 = sphi 0, %s45
    %s47 = sphi 0, %s45
    %s48 = sphi 0, %s47
    %s62 = sphi 0, %s48
    %s66 = sphi 0, %s66
    %s68 = sphi 0, %s66
    %s69 = sphi 0, %s68
    %s83 = sphi 0, %s69
    %s87 = sphi 0, %s87
    %s89 = sphi 0, %s87
    %s90 = sphi 0, %s89
    %s104 = sphi 0, %s90
    %s108 = sphi 0, %s108
    %s110 = sphi 0, %s108
    %s111 = sphi 0, %s110
    %s125 = sphi 0, %s111
    %s131 = sphi 0, %s133
    %s134 = sphi 0, %s131
    %s135 = sphi 0, %s134
    %s151 = sphi 0, %s135
  $region4: #{tpu_custom_call.1} parent=0 // loop_header_branch
    %14 = sbr.rel (%p12) target = $region8
  $region5: #{tpu_custom_call.1} parent=0 // loop_body
    %s16 = ssub.s32 %s11, 1
    %s17 = ssub.s32 %s11, 2
    %s18 = sadd.s32 %s11, 1
    %s19 = ssub.s32 %s11, %s18
    %p20 = scmp.eq.s32.totalorder %s19, 0
    %s22 = sadd.s32 %s21, 1
    %s23 = scalar_select %p20, %s21, %s22
    %p26 = pneg %p20
    %p27 = scmp.eq.s32.totalorder %s11, 1
    %p28 = por %p26, %p27
    %p29 = scmp.ne.s32.totalorder %s21, %s24
    %p30 = scmp.eq.s32.totalorder %s11, 0
    %p31 = por %p29, %p30
    %p32 = scmp.ne.s32.totalorder %s21, %s24
    %p33 = scmp.eq.s32.totalorder %s16, 1
    %p34 = por %p32, %p33
    %p35 = scmp.ne.s32.totalorder %s24, %s25
    %p36 = scmp.eq.s32.totalorder %s16, 0
    %p37 = por %p35, %p36
    %p38 = scmp.ne.s32.totalorder %s24, %s25
    %p39 = scmp.eq.s32.totalorder %s17, 1
    %p40 = por %p38, %p39
    %p42 = scmp.ne.s32.totalorder %s25, %s41
    %p43 = scmp.eq.s32.totalorder %s17, 0
    %p44 = por %p42, %p43
    %s46 = sadd.s32 %s45, 1
    %p49 = scmp.eq.s32.totalorder %s11, 1
    %p50 = scmp.ne.s32.totalorder %s45, %s47
    %p51 = scmp.eq.s32.totalorder %s11, 0
    %p52 = por %p50, %p51
    %p53 = scmp.ne.s32.totalorder %s45, %s47
    %p54 = scmp.eq.s32.totalorder %s16, 1
    %p55 = por %p53, %p54
    %p56 = scmp.ne.s32.totalorder %s47, %s48
    %p57 = scmp.eq.s32.totalorder %s16, 0
    %p58 = por %p56, %p57
    %p59 = scmp.ne.s32.totalorder %s47, %s48
    %p60 = scmp.eq.s32.totalorder %s17, 1
    %p61 = por %p59, %p60
    %p63 = scmp.ne.s32.totalorder %s48, %s62
    %p64 = scmp.eq.s32.totalorder %s17, 0
    %p65 = por %p63, %p64
    %s67 = sadd.s32 %s66, 1
    %p70 = scmp.eq.s32.totalorder %s11, 1
    %p71 = scmp.ne.s32.totalorder %s66, %s68
    %p72 = scmp.eq.s32.totalorder %s11, 0
    %p73 = por %p71, %p72
    %p74 = scmp.ne.s32.totalorder %s66, %s68
    %p75 = scmp.eq.s32.totalorder %s16, 1
    %p76 = por %p74, %p75
    %p77 = scmp.ne.s32.totalorder %s68, %s69
    %p78 = scmp.eq.s32.totalorder %s16, 0
    %p79 = por %p77, %p78
    %p80 = scmp.ne.s32.totalorder %s68, %s69
    %p81 = scmp.eq.s32.totalorder %s17, 1
    %p82 = por %p80, %p81
    %p84 = scmp.ne.s32.totalorder %s69, %s83
    %p85 = scmp.eq.s32.totalorder %s17, 0
    %p86 = por %p84, %p85
    %s88 = sadd.s32 %s87, 1
    %p91 = scmp.eq.s32.totalorder %s11, 1
    %p92 = scmp.ne.s32.totalorder %s87, %s89
    %p93 = scmp.eq.s32.totalorder %s11, 0
    %p94 = por %p92, %p93
    %p95 = scmp.ne.s32.totalorder %s87, %s89
    %p96 = scmp.eq.s32.totalorder %s16, 1
    %p97 = por %p95, %p96
    %p98 = scmp.ne.s32.totalorder %s89, %s90
    %p99 = scmp.eq.s32.totalorder %s16, 0
    %p100 = por %p98, %p99
    %p101 = scmp.ne.s32.totalorder %s89, %s90
    %p102 = scmp.eq.s32.totalorder %s17, 1
    %p103 = por %p101, %p102
    %p105 = scmp.ne.s32.totalorder %s90, %s104
    %p106 = scmp.eq.s32.totalorder %s17, 0
    %p107 = por %p105, %p106
    %s109 = sadd.s32 %s108, 1
    %p112 = scmp.eq.s32.totalorder %s11, 1
    %p113 = scmp.ne.s32.totalorder %s108, %s110
    %p114 = scmp.eq.s32.totalorder %s11, 0
    %p115 = por %p113, %p114
    %p116 = scmp.ne.s32.totalorder %s108, %s110
    %p117 = scmp.eq.s32.totalorder %s16, 1
    %p118 = por %p116, %p117
    %p119 = scmp.ne.s32.totalorder %s110, %s111
    %p120 = scmp.eq.s32.totalorder %s16, 0
    %p121 = por %p119, %p120
    %p122 = scmp.ne.s32.totalorder %s110, %s111
    %p123 = scmp.eq.s32.totalorder %s17, 1
    %p124 = por %p122, %p123
    %p126 = scmp.ne.s32.totalorder %s111, %s125
    %p127 = scmp.eq.s32.totalorder %s17, 0
    %p128 = por %p126, %p127
    %s129 = ssub.s32 %s11, %s18
    %p130 = scmp.eq.s32.totalorder %s129, 0
    %s132 = sadd.s32 %s131, 1
    %s133 = scalar_select %p130, %s131, %s132
    %p136 = pneg %p130
    %p137 = scmp.eq.s32.totalorder %s11, 1
    %p138 = por %p136, %p137
    %p139 = scmp.ne.s32.totalorder %s131, %s134
    %p140 = scmp.eq.s32.totalorder %s11, 0
    %p141 = por %p139, %p140
    %p142 = scmp.ne.s32.totalorder %s131, %s134
    %p143 = scmp.eq.s32.totalorder %s16, 1
    %p144 = por %p142, %p143
    %p145 = scmp.ne.s32.totalorder %s134, %s135
    %p146 = scmp.eq.s32.totalorder %s16, 0
    %p147 = por %p145, %p146
    %p148 = scmp.ne.s32.totalorder %s134, %s135
    %p149 = scmp.eq.s32.totalorder %s17, 1
    %p150 = por %p148, %p149
    %p152 = scmp.ne.s32.totalorder %s135, %s151
    %p153 = scmp.eq.s32.totalorder %s17, 0
    %p154 = por %p152, %p153
    %p155 = scmp.le.s32.totalorder 1, %s11
    %p156 = scmp.lt.s32.totalorder %s11, 3
    %p157 = pnand %p155, %p156
    %p158 = pneg %p157
    // Predicated region
    $region9: #{tpu_custom_call.1} parent=5 // pred_check
      _
    $region10: #{tpu_custom_call.1} parent=5 // pred_check_branch
      %160 = sbr.rel (%p157) target = $region12
    $region11: #{tpu_custom_call.1} parent=5 // pred_region
      %s161 = ssub.s32 %s11, 1
      // Predicated region
      $region13: #{tpu_custom_call.1} parent=11 // pred_check
        %p162 = pneg %p58
      $region14: #{tpu_custom_call.1} parent=11 // pred_check_branch
        %164 = sbr.rel (%p162) target = $region16
      $region15: #{tpu_custom_call.1} parent=11 // pred_region
        _
      $region16: #{tpu_custom_call.1} parent=11 // pred_fallthru
        _
      // Predicated region
      $region17: #{tpu_custom_call.1} parent=11 // pred_check
        %p165 = pneg %p79
      $region18: #{tpu_custom_call.1} parent=11 // pred_check_branch
        %167 = sbr.rel (%p165) target = $region20
      $region19: #{tpu_custom_call.1} parent=11 // pred_region
        _
      $region20: #{tpu_custom_call.1} parent=11 // pred_fallthru
        _
      // Predicated region
      $region21: #{tpu_custom_call.1} parent=11 // pred_check
        %p168 = pneg %p100
      $region22: #{tpu_custom_call.1} parent=11 // pred_check_branch
        %170 = sbr.rel (%p168) target = $region24
      $region23: #{tpu_custom_call.1} parent=11 // pred_region
        _
      $region24: #{tpu_custom_call.1} parent=11 // pred_fallthru
        _
      // Predicated region
      $region25: #{tpu_custom_call.1} parent=11 // pred_check
        %p171 = pneg %p121
      $region26: #{tpu_custom_call.1} parent=11 // pred_check_branch
        %173 = sbr.rel (%p171) target = $region28
      $region27: #{tpu_custom_call.1} parent=11 // pred_region
        _
      $region28: #{tpu_custom_call.1} parent=11 // pred_fallthru
        _
    $region12: #{tpu_custom_call.1} parent=5 // pred_fallthru
      _
    %p174 = scmp.lt.s32.totalorder %s11, 2
    // Predicated region
    $region29: #{tpu_custom_call.1} parent=5 // pred_check
      %p175 = pneg %p174
    $region30: #{tpu_custom_call.1} parent=5 // pred_check_branch
      %177 = sbr.rel (%p175) target = $region32
    $region31: #{tpu_custom_call.1} parent=5 // pred_region
      // Predicated region
      $region33: #{tpu_custom_call.1} parent=31 // pred_check
        %p178 = pneg %p31
      $region34: #{tpu_custom_call.1} parent=31 // pred_check_branch
        %180 = sbr.rel (%p178) target = $region36
      $region35: #{tpu_custom_call.1} parent=31 // pred_region
        %s181 = smul.u32 2, %s11
        %p182 = scmp.lt.s32.totalorder %s181, 3
        %s183 = scalar_select %p182, %s181, 3
        %s184 = smul.addr %s183, 4
        %s185 = scalar_lea.vmem %s0, %s184
        %s186 = smul.u32 2, %s11
      $region36: #{tpu_custom_call.1} parent=31 // pred_fallthru
        _
    $region32: #{tpu_custom_call.1} parent=5 // pred_fallthru
      _
    %p187 = scmp.le.s32.totalorder 1, %s11
    %p188 = scmp.lt.s32.totalorder %s11, 3
    %p189 = pnand %p187, %p188
    %p190 = pneg %p189
    // Predicated region
    $region37: #{tpu_custom_call.1} parent=5 // pred_check
      _
    $region38: #{tpu_custom_call.1} parent=5 // pred_check_branch
      %192 = sbr.rel (%p189) target = $region40
    $region39: #{tpu_custom_call.1} parent=5 // pred_region
      %s193 = ssub.s32 %s11, 1
      %s194 = smul.u32 2, %s16
      %p195 = scmp.lt.s32.totalorder %s194, 3
      %s196 = scalar_select %p195, %s194, 3
      %s197 = smul.addr %s196, 4
      %s198 = scalar_lea.vmem %s0, %s197
      %p199 = pneg %p37
      %p200 = pneg %p34
      %p201 = pneg %p58
      %p202 = pneg %p55
      %p203 = pneg %p79
      %p204 = pneg %p76
      %p205 = pneg %p100
      %p206 = pneg %p97
      %p207 = pneg %p121
      %p208 = pneg %p118
      %p209 = pneg %p147
      %p210 = pneg %p144
      %s211 = smul.u32 2, %s16
      %p212 = scmp.lt.s32.totalorder %s211, 3
      %s213 = scalar_select %p212, %s211, 3
      %s214 = smul.addr %s213, 8
      %s215 = scalar_lea.vmem %s5, %s214
      %s216 = smul.u32 2, %s16
      %p217 = scmp.lt.s32.totalorder %s216, 3
      %s218 = scalar_select %p217, %s216, 3
      %s219 = smul.addr %s218, 4
      %s220 = scalar_lea.vmem %s0, %s219
      %s221 = smul.u32 2, %s16
      %s222 = smul.u32 2, %s16
      %p223 = scmp.lt.s32.totalorder %s222, 3
      %s224 = scalar_select %p223, %s222, 3
      %s225 = smul.addr %s224, 8
      %s226 = scalar_lea.vmem %s5, %s225
      %s227 = smul.u32 2, %s16
      %v229 = vld [vmem:[%s220] sm:$0xf]
      %v230 = vld [vmem:[%s220 + $0x4] sm:$0xf]
      %v231 = vld [vmem:[%s1] sm:$0xf]
      %v232 = vld [vmem:[%s1 + $0x4] sm:$0xf]
      %v235 = vunpack.c.l.b16 %v229
      %v236 = vunpack.c.l.b16 %v230
      %v237 = vpack.c.b16 %v236, %v235
      %v240 = vunpack.c.l.b16 %v231
      %v241 = vunpack.c.l.b16 %v232
      %v242 = vpack.c.b16 %v241, %v240
      %vm244 = vcmask 130048
      %v246 = vsel %vm244, %v237, 0
      %248 = vmatprep.subr.bf16.mxu0 0
      %249 = vmatpush1.bf16.msra.mxu0 %v242
      %250 = vmatprep.subr.bf16.mxu0 0
      %251 = vmatpush1.bf16.msra.mxu0 0
      %252 = vmatprep.subr.bf16.mxu0 0
      %253 = vmatpush1.bf16.msra.mxu0 0
      %254 = vmatprep.subr.bf16.mxu0 0
      %255 = vmatpush1.bf16.msra.mxu0 0
      %256 = vmatprep.subr.bf16.mxu0 0
      %257 = vmatpush1.bf16.msra.mxu0 0
      %258 = vmatprep.subr.bf16.mxu0 0
      %259 = vmatpush1.bf16.msra.mxu0 0
      %260 = vmatprep.subr.bf16.mxu0 0
      %261 = vmatpush1.bf16.msra.mxu0 0
      %262 = vmatprep.subr.bf16.mxu0 0
      %263 = vmatpush1.bf16.msra.mxu0 0
      %264 = vmatprep.subr.bf16.mxu0 0
      %265 = vmatpush1.bf16.msra.mxu0 0
      %266 = vmatprep.subr.bf16.mxu0 0
      %267 = vmatpush1.bf16.msra.mxu0 0
      %268 = vmatprep.subr.bf16.mxu0 0
      %269 = vmatpush1.bf16.msra.mxu0 0
      %270 = vmatprep.subr.bf16.mxu0 0
      %271 = vmatpush1.bf16.msra.mxu0 0
      %272 = vmatprep.subr.bf16.mxu0 0
      %273 = vmatpush1.bf16.msra.mxu0 0
      %274 = vmatprep.subr.bf16.mxu0 0
      %275 = vmatpush1.bf16.msra.mxu0 0
      %276 = vmatprep.subr.bf16.mxu0 0
      %277 = vmatpush1.bf16.msra.mxu0 0
      %278 = vmatprep.subr.bf16.mxu0 0
      %279 = vmatpush1.bf16.msra.mxu0 0
      %280 = vmatprep.mubr.bf16.mxu0 0
      %281 = vmatmul.mubr.bf16.gmra.mrb[0].mxu0 %v246
      %v282 = vpop.f32.mrb[0].mxu0
      %v283 = vadd.f32 0.0, %v282
      %v284 = vpop.f32.mrb[0].mxu0
      %v285 = vpop.f32.mrb[0].mxu0
      %v286 = vadd.f32 0.0, %v285
      %v287 = vpop.f32.mrb[0].mxu0
      %288 = vdwg.mxu0
      %289 = vrot.lane.b32.xlu0 %v283, 64
      %v290 = vpop.permute.xlu0 %289
      %291 = vrot.lane.b32.xlu0 %v286, 64
      %v292 = vpop.permute.xlu0 %291
      %v293 = vld [vmem:[%s2] sm:$0xf]
      %v294 = vunpack.c.l.bf16 %v293
      %v295 = vlaneseq
      %v296 = vshrl.u32 %v295, 7
      %v297 = vsub.s32 0, %v296
      %v298 = vrot.slane %v283, %v297
      %v299 = vlaneseq
      %v300 = vshrl.u32 %v299, 7
      %v301 = vsub.s32 0, %v300
      %v302 = vrot.slane %v286, %v301
      %v303 = vmul.f32 %v298, %v294
      %v304 = vmul.f32 %v302, %v294
      %v305 = vadd.f32 %v303, 0.0
      %v306 = vadd.f32 %v304, 0.0
      %v307 = vld [vmem:[%s3] sm:$0xf]
      %v308 = vunpack.c.l.bf16 %v307
      %v309 = vlaneseq
      %v310 = vshrl.u32 %v309, 7
      %v311 = vsub.s32 0, %v310
      %v312 = vrot.slane %v290, %v311
      %v313 = vlaneseq
      %v314 = vshrl.u32 %v313, 7
      %v315 = vsub.s32 0, %v314
      %v316 = vrot.slane %v292, %v315
      %v317 = vmul.f32 %v312, %v308
      %v318 = vmul.f32 %v316, %v308
      %v319 = vadd.f32 %v305, %v317
      %v320 = vadd.f32 %v306, %v318
      %s321 = scalar_lea.vmem %s2, 4
      %v322 = vld [vmem:[%s321] sm:$0xf]
      %v323 = vunpack.c.l.bf16 %v322
      %v324 = vlaneseq
      %v325 = vshrl.u32 %v324, 7
      %v326 = vsub.s32 1, %v325
      %v327 = vrot.slane %v283, %v326
      %v328 = vlaneseq
      %v329 = vshrl.u32 %v328, 7
      %v330 = vsub.s32 1, %v329
      %v331 = vrot.slane %v286, %v330
      %v332 = vmul.f32 %v327, %v323
      %v333 = vmul.f32 %v331, %v323
      %v334 = vadd.f32 %v319, %v332
      %v335 = vadd.f32 %v320, %v333
      %s336 = scalar_lea.vmem %s3, 4
      %v337 = vld [vmem:[%s336] sm:$0xf]
      %v338 = vunpack.c.l.bf16 %v337
      %v339 = vlaneseq
      %v340 = vshrl.u32 %v339, 7
      %v341 = vsub.s32 1, %v340
      %v342 = vrot.slane %v290, %v341
      %v343 = vlaneseq
      %v344 = vshrl.u32 %v343, 7
      %v345 = vsub.s32 1, %v344
      %v346 = vrot.slane %v292, %v345
      %v347 = vmul.f32 %v342, %v338
      %v348 = vmul.f32 %v346, %v338
      %v349 = vadd.f32 %v334, %v347
      %v350 = vadd.f32 %v335, %v348
      %s351 = scalar_lea.vmem %s2, 8
      %v352 = vld [vmem:[%s351] sm:$0xf]
      %v353 = vunpack.c.l.bf16 %v352
      %v354 = vlaneseq
      %v355 = vshrl.u32 %v354, 7
      %v356 = vsub.s32 2, %v355
      %v357 = vrot.slane %v283, %v356
      %v358 = vlaneseq
      %v359 = vshrl.u32 %v358, 7
      %v360 = vsub.s32 2, %v359
      %v361 = vrot.slane %v286, %v360
      %v362 = vmul.f32 %v357, %v353
      %v363 = vmul.f32 %v361, %v353
      %v364 = vadd.f32 %v349, %v362
      %v365 = vadd.f32 %v350, %v363
      %s366 = scalar_lea.vmem %s3, 8
      %v367 = vld [vmem:[%s366] sm:$0xf]
      %v368 = vunpack.c.l.bf16 %v367
      %v369 = vlaneseq
      %v370 = vshrl.u32 %v369, 7
      %v371 = vsub.s32 2, %v370
      %v372 = vrot.slane %v290, %v371
      %v373 = vlaneseq
      %v374 = vshrl.u32 %v373, 7
      %v375 = vsub.s32 2, %v374
      %v376 = vrot.slane %v292, %v375
      %v377 = vmul.f32 %v372, %v368
      %v378 = vmul.f32 %v376, %v368
      %v379 = vadd.f32 %v364, %v377
      %v380 = vadd.f32 %v365, %v378
      %s381 = scalar_lea.vmem %s2, 12
      %v382 = vld [vmem:[%s381] sm:$0xf]
      %v383 = vunpack.c.l.bf16 %v382
      %v384 = vlaneseq
      %v385 = vshrl.u32 %v384, 7
      %v386 = vsub.s32 3, %v385
      %v387 = vrot.slane %v283, %v386
      %v388 = vlaneseq
      %v389 = vshrl.u32 %v388, 7
      %v390 = vsub.s32 3, %v389
      %v391 = vrot.slane %v286, %v390
      %v392 = vmul.f32 %v387, %v383
      %v393 = vmul.f32 %v391, %v383
      %v394 = vadd.f32 %v379, %v392
      %v395 = vadd.f32 %v380, %v393
      %s396 = scalar_lea.vmem %s3, 12
      %v397 = vld [vmem:[%s396] sm:$0xf]
      %v398 = vunpack.c.l.bf16 %v397
      %v399 = vlaneseq
      %v400 = vshrl.u32 %v399, 7
      %v401 = vsub.s32 3, %v400
      %v402 = vrot.slane %v290, %v401
      %v403 = vlaneseq
      %v404 = vshrl.u32 %v403, 7
      %v405 = vsub.s32 3, %v404
      %v406 = vrot.slane %v292, %v405
      %v407 = vmul.f32 %v402, %v398
      %v408 = vmul.f32 %v406, %v398
      %v409 = vadd.f32 %v394, %v407
      %v410 = vadd.f32 %v395, %v408
      %s411 = scalar_lea.vmem %s2, 16
      %v412 = vld [vmem:[%s411] sm:$0xf]
      %v413 = vunpack.c.l.bf16 %v412
      %v414 = vlaneseq
      %v415 = vshrl.u32 %v414, 7
      %v416 = vsub.s32 4, %v415
      %v417 = vrot.slane %v283, %v416
      %v418 = vlaneseq
      %v419 = vshrl.u32 %v418, 7
      %v420 = vsub.s32 4, %v419
      %v421 = vrot.slane %v286, %v420
      %v422 = vmul.f32 %v417, %v413
      %v423 = vmul.f32 %v421, %v413
      %v424 = vadd.f32 %v409, %v422
      %v425 = vadd.f32 %v410, %v423
      %s426 = scalar_lea.vmem %s3, 16
      %v427 = vld [vmem:[%s426] sm:$0xf]
      %v428 = vunpack.c.l.bf16 %v427
      %v429 = vlaneseq
      %v430 = vshrl.u32 %v429, 7
      %v431 = vsub.s32 4, %v430
      %v432 = vrot.slane %v290, %v431
      %v433 = vlaneseq
      %v434 = vshrl.u32 %v433, 7
      %v435 = vsub.s32 4, %v434
      %v436 = vrot.slane %v292, %v435
      %v437 = vmul.f32 %v432, %v428
      %v438 = vmul.f32 %v436, %v428
      %v439 = vadd.f32 %v424, %v437
      %v440 = vadd.f32 %v425, %v438
      %s441 = scalar_lea.vmem %s2, 20
      %v442 = vld [vmem:[%s441] sm:$0xf]
      %v443 = vunpack.c.l.bf16 %v442
      %v444 = vlaneseq
      %v445 = vshrl.u32 %v444, 7
      %v446 = vsub.s32 5, %v445
      %v447 = vrot.slane %v283, %v446
      %v448 = vlaneseq
      %v449 = vshrl.u32 %v448, 7
      %v450 = vsub.s32 5, %v449
      %v451 = vrot.slane %v286, %v450
      %v452 = vmul.f32 %v447, %v443
      %v453 = vmul.f32 %v451, %v443
      %v454 = vadd.f32 %v439, %v452
      %v455 = vadd.f32 %v440, %v453
      %s456 = scalar_lea.vmem %s3, 20
      %v457 = vld [vmem:[%s456] sm:$0xf]
      %v458 = vunpack.c.l.bf16 %v457
      %v459 = vlaneseq
      %v460 = vshrl.u32 %v459, 7
      %v461 = vsub.s32 5, %v460
      %v462 = vrot.slane %v290, %v461
      %v463 = vlaneseq
      %v464 = vshrl.u32 %v463, 7
      %v465 = vsub.s32 5, %v464
      %v466 = vrot.slane %v292, %v465
      %v467 = vmul.f32 %v462, %v458
      %v468 = vmul.f32 %v466, %v458
      %v469 = vadd.f32 %v454, %v467
      %v470 = vadd.f32 %v455, %v468
      %s471 = scalar_lea.vmem %s2, 24
      %v472 = vld [vmem:[%s471] sm:$0xf]
      %v473 = vunpack.c.l.bf16 %v472
      %v474 = vlaneseq
      %v475 = vshrl.u32 %v474, 7
      %v476 = vsub.s32 6, %v475
      %v477 = vrot.slane %v283, %v476
      %v478 = vlaneseq
      %v479 = vshrl.u32 %v478, 7
      %v480 = vsub.s32 6, %v479
      %v481 = vrot.slane %v286, %v480
      %v482 = vmul.f32 %v477, %v473
      %v483 = vmul.f32 %v481, %v473
      %v484 = vadd.f32 %v469, %v482
      %v485 = vadd.f32 %v470, %v483
      %s486 = scalar_lea.vmem %s3, 24
      %v487 = vld [vmem:[%s486] sm:$0xf]
      %v488 = vunpack.c.l.bf16 %v487
      %v489 = vlaneseq
      %v490 = vshrl.u32 %v489, 7
      %v491 = vsub.s32 6, %v490
      %v492 = vrot.slane %v290, %v491
      %v493 = vlaneseq
      %v494 = vshrl.u32 %v493, 7
      %v495 = vsub.s32 6, %v494
      %v496 = vrot.slane %v292, %v495
      %v497 = vmul.f32 %v492, %v488
      %v498 = vmul.f32 %v496, %v488
      %v499 = vadd.f32 %v484, %v497
      %v500 = vadd.f32 %v485, %v498
      %s501 = scalar_lea.vmem %s2, 28
      %v502 = vld [vmem:[%s501] sm:$0xf]
      %v503 = vunpack.c.l.bf16 %v502
      %v504 = vlaneseq
      %v505 = vshrl.u32 %v504, 7
      %v506 = vsub.s32 7, %v505
      %v507 = vrot.slane %v283, %v506
      %v508 = vlaneseq
      %v509 = vshrl.u32 %v508, 7
      %v510 = vsub.s32 7, %v509
      %v511 = vrot.slane %v286, %v510
      %v512 = vmul.f32 %v507, %v503
      %v513 = vmul.f32 %v511, %v503
      %v514 = vadd.f32 %v499, %v512
      %v515 = vadd.f32 %v500, %v513
      %s516 = scalar_lea.vmem %s3, 28
      %v517 = vld [vmem:[%s516] sm:$0xf]
      %v518 = vunpack.c.l.bf16 %v517
      %v519 = vlaneseq
      %v520 = vshrl.u32 %v519, 7
      %v521 = vsub.s32 7, %v520
      %v522 = vrot.slane %v290, %v521
      %v523 = vlaneseq
      %v524 = vshrl.u32 %v523, 7
      %v525 = vsub.s32 7, %v524
      %v526 = vrot.slane %v292, %v525
      %v527 = vmul.f32 %v522, %v518
      %v528 = vmul.f32 %v526, %v518
      %v529 = vadd.f32 %v514, %v527
      %v530 = vadd.f32 %v515, %v528
      %v531 = vpack.c.bf16 %v530, %v529
      %v532 = vld [vmem:[%s4] sm:$0xf]
      %v533 = vld [vmem:[%s4 + $0x4] sm:$0xf]
      %v534 = vld [vmem:[%s4 + $0x8] sm:$0xf]
      %v535 = vld [vmem:[%s4 + $0xc] sm:$0xf]
      %v536 = vld [vmem:[%s4 + $0x10] sm:$0xf]
      %v537 = vld [vmem:[%s4 + $0x14] sm:$0xf]
      %v538 = vld [vmem:[%s4 + $0x18] sm:$0xf]
      %v539 = vld [vmem:[%s4 + $0x1c] sm:$0xf]
      %v540 = vld [vmem:[%s4 + $0x20] sm:$0xf]
      %v541 = vld [vmem:[%s4 + $0x24] sm:$0xf]
      %v542 = vld [vmem:[%s4 + $0x28] sm:$0xf]
      %v543 = vld [vmem:[%s4 + $0x2c] sm:$0xf]
      %v544 = vld [vmem:[%s4 + $0x30] sm:$0xf]
      %v545 = vld [vmem:[%s4 + $0x34] sm:$0xf]
      %v546 = vld [vmem:[%s4 + $0x38] sm:$0xf]
      %v547 = vld [vmem:[%s4 + $0x3c] sm:$0xf]
      %v564 = vunpack.c.l.b16 %v532
      %v565 = vunpack.c.l.b16 %v533
      %v566 = vunpack.c.l.b16 %v534
      %v567 = vunpack.c.l.b16 %v535
      %v568 = vunpack.c.l.b16 %v536
      %v569 = vunpack.c.l.b16 %v537
      %v570 = vunpack.c.l.b16 %v538
      %v571 = vunpack.c.l.b16 %v539
      %v572 = vunpack.c.l.b16 %v540
      %v573 = vunpack.c.l.b16 %v541
      %v574 = vunpack.c.l.b16 %v542
      %v575 = vunpack.c.l.b16 %v543
      %v576 = vunpack.c.l.b16 %v544
      %v577 = vunpack.c.l.b16 %v545
      %v578 = vunpack.c.l.b16 %v546
      %v579 = vunpack.c.l.b16 %v547
      %v580 = vpack.c.b16 %v565, %v564
      %v581 = vpack.c.b16 %v567, %v566
      %v582 = vpack.c.b16 %v569, %v568
      %v583 = vpack.c.b16 %v571, %v570
      %v584 = vpack.c.b16 %v573, %v572
      %v585 = vpack.c.b16 %v575, %v574
      %v586 = vpack.c.b16 %v577, %v576
      %v587 = vpack.c.b16 %v579, %v578
      %596 = vmatprep.subr.bf16.mxu0 0
      %597 = vmatpush1.bf16.msra.mxu0 %v580
      %598 = vmatprep.subr.bf16.mxu0 0
      %599 = vmatpush1.bf16.msra.mxu0 %v581
      %600 = vmatprep.subr.bf16.mxu0 0
      %601 = vmatpush1.bf16.msra.mxu0 %v582
      %602 = vmatprep.subr.bf16.mxu0 0
      %603 = vmatpush1.bf16.msra.mxu0 %v583
      %604 = vmatprep.subr.bf16.mxu0 0
      %605 = vmatpush1.bf16.msra.mxu0 %v584
      %606 = vmatprep.subr.bf16.mxu0 0
      %607 = vmatpush1.bf16.msra.mxu0 %v585
      %608 = vmatprep.subr.bf16.mxu0 0
      %609 = vmatpush1.bf16.msra.mxu0 %v586
      %610 = vmatprep.subr.bf16.mxu0 0
      %611 = vmatpush1.bf16.msra.mxu0 %v587
      %612 = vmatprep.subr.bf16.mxu0 0
      %613 = vmatpush1.bf16.msra.mxu0 0
      %614 = vmatprep.subr.bf16.mxu0 0
      %615 = vmatpush1.bf16.msra.mxu0 0
      %616 = vmatprep.subr.bf16.mxu0 0
      %617 = vmatpush1.bf16.msra.mxu0 0
      %618 = vmatprep.subr.bf16.mxu0 0
      %619 = vmatpush1.bf16.msra.mxu0 0
      %620 = vmatprep.subr.bf16.mxu0 0
      %621 = vmatpush1.bf16.msra.mxu0 0
      %622 = vmatprep.subr.bf16.mxu0 0
      %623 = vmatpush1.bf16.msra.mxu0 0
      %624 = vmatprep.subr.bf16.mxu0 0
      %625 = vmatpush1.bf16.msra.mxu0 0
      %626 = vmatprep.subr.bf16.mxu0 0
      %627 = vmatpush1.bf16.msra.mxu0 0
      %628 = vmatprep.mubr.bf16.mxu0 0
      %629 = vmatmul.mubr.bf16.gmra.mrb[0].mxu0 %v531
      %v630 = vpop.f32.mrb[0].mxu0
      %v631 = vadd.f32 0.0, %v630
      %v632 = vpop.f32.mrb[0].mxu0
      %v633 = vpop.f32.mrb[0].mxu0
      %v634 = vadd.f32 0.0, %v633
      %v635 = vpop.f32.mrb[0].mxu0
      %636 = vdwg.mxu0
      %637 = vst.msk [vmem:[%s226] sm:$0xff] %vm244, %v631
      %638 = vst.msk [vmem:[%s226 + $0x8] sm:$0xff] %vm244, %v634
      %s639 = smul.u32 2, %s16
      %p640 = scmp.lt.s32.totalorder %s639, 3
      %s641 = scalar_select %p640, %s639, 3
      %s642 = smul.addr %s641, 8
      %s643 = scalar_lea.vmem %s5, %s642
      // Predicated region
      $region41: #{tpu_custom_call.1} parent=39 // pred_check
        %p644 = pneg %p144
      $region42: #{tpu_custom_call.1} parent=39 // pred_check_branch
        %646 = sbr.rel (%p644) target = $region44
      $region43: #{tpu_custom_call.1} parent=39 // pred_region
        %s647 = smul.u32 2, %s16
      $region44: #{tpu_custom_call.1} parent=39 // pred_fallthru
        _
    $region40: #{tpu_custom_call.1} parent=5 // pred_fallthru
      _
    %p648 = scmp.le.s32.totalorder 2, %s11
    // Predicated region
    $region45: #{tpu_custom_call.1} parent=5 // pred_check
      %p649 = pneg %p648
    $region46: #{tpu_custom_call.1} parent=5 // pred_check_branch
      %651 = sbr.rel (%p649) target = $region48
    $region47: #{tpu_custom_call.1} parent=5 // pred_region
      %s652 = ssub.s32 %s11, 2
      // Predicated region
      $region49: #{tpu_custom_call.1} parent=47 // pred_check
        %p653 = pneg %p150
      $region50: #{tpu_custom_call.1} parent=47 // pred_check_branch
        %655 = sbr.rel (%p653) target = $region52
      $region51: #{tpu_custom_call.1} parent=47 // pred_region
        %s656 = smul.u32 2, %s17
        %p657 = scmp.lt.s32.totalorder %s656, 3
        %s658 = scalar_select %p657, %s656, 3
        %s659 = smul.addr %s658, 8
        %s660 = scalar_lea.vmem %s5, %s659
      $region52: #{tpu_custom_call.1} parent=47 // pred_fallthru
        _
    $region48: #{tpu_custom_call.1} parent=5 // pred_fallthru
      _
  $region6: #{tpu_custom_call.1} parent=0 // loop_footer
    %s15 = sadd.s32 1, %s11
  $region7: #{tpu_custom_call.1} parent=0 // loop_footer_branch
    %10 = sbr.rel target = $region3
  $region8: #{tpu_custom_call.1} parent=0 // loop_exit
    _

// kernel: tpu_custom_call.1
$region0: #{tpu_custom_call.1}
  #allocation0 [shape = 'u32[]', space=smem, size = 0x4, offset = 0x4, fixed_abs, tag = 'smem constant byte address 0x4 - core index']
  #allocation1 [shape = 'u32[144,128]{1,0:T(1,128)}', space=vmem, size = 0x12000, scoped, tag = 'internal scratch']
  %s0 = inlined_call_operand.vmem [shape: bf16[32,16], index: 0, kind: input, shape index: {}]
  %s1 = inlined_call_operand.vmem [shape: bf16[16,128], index: 1, kind: input, shape index: {}]
  %s2 = inlined_call_operand.vmem [shape: bf16[8,8,128], index: 2, kind: input, shape index: {}]
  %s3 = inlined_call_operand.vmem [shape: bf16[8,8,128], index: 3, kind: input, shape index: {}]
  %s4 = inlined_call_operand.vmem [shape: bf16[128,16], index: 4, kind: input, shape index: {}]
  %s5 = inlined_call_operand.vmem [shape: f32[32,16], index: 5, kind: output, shape index: {}]
  %s6 = sld [smem:[#allocation0]]
  $region53: #{tpu_custom_call.1} parent=0
    _
  %s8 = ssub.s32 1, %s6
  %s9 = scalar_select 0, %s8, %s6
  loop: start=0, step=1, limit=4
  $region2: #{tpu_custom_call.1} parent=0 // loop_pre_header
    _
  $region3: #{tpu_custom_call.1} parent=0 // loop_header
    %s11 = sphi 0, %s15
    %p12 = scmp.ge.s32.totalorder %s11, 4
    %s21 = sphi 0, %s23
    %s24 = sphi 0, %s21
    %s25 = sphi 0, %s24
    %s41 = sphi 0, %s25
    %s45 = sphi 0, %s45
    %s47 = sphi 0, %s45
    %s48 = sphi 0, %s47
    %s62 = sphi 0, %s48
    %s66 = sphi 0, %s66
    %s68 = sphi 0, %s66
    %s69 = sphi 0, %s68
    %s83 = sphi 0, %s69
    %s87 = sphi 0, %s87
    %s89 = sphi 0, %s87
    %s90 = sphi 0, %s89
    %s104 = sphi 0, %s90
    %s108 = sphi 0, %s108
    %s110 = sphi 0, %s108
    %s111 = sphi 0, %s110
    %s125 = sphi 0, %s111
    %s131 = sphi 0, %s133
    %s134 = sphi 0, %s131
    %s135 = sphi 0, %s134
    %s151 = sphi 0, %s135
  $region4: #{tpu_custom_call.1} parent=0 // loop_header_branch
    %14 = sbr.rel (%p12) target = $region8
  $region5: #{tpu_custom_call.1} parent=0 // loop_body
    %s16 = ssub.s32 %s11, 1
    %s17 = ssub.s32 %s11, 2
    %s18 = sadd.s32 %s11, 1
    %s19 = ssub.s32 %s11, %s18
    %p20 = scmp.eq.s32.totalorder %s19, 0
    %s22 = sadd.s32 %s21, 1
    %s23 = scalar_select %p20, %s21, %s22
    %p26 = pneg %p20
    %p27 = scmp.eq.s32.totalorder %s11, 1
    %p28 = por %p26, %p27
    %p29 = scmp.ne.s32.totalorder %s21, %s24
    %p30 = scmp.eq.s32.totalorder %s11, 0
    %p31 = por %p29, %p30
    %p32 = scmp.ne.s32.totalorder %s21, %s24
    %p33 = scmp.eq.s32.totalorder %s16, 1
    %p34 = por %p32, %p33
    %p35 = scmp.ne.s32.totalorder %s24, %s25
    %p36 = scmp.eq.s32.totalorder %s16, 0
    %p37 = por %p35, %p36
    %p38 = scmp.ne.s32.totalorder %s24, %s25
    %p39 = scmp.eq.s32.totalorder %s17, 1
    %p40 = por %p38, %p39
    %p42 = scmp.ne.s32.totalorder %s25, %s41
    %p43 = scmp.eq.s32.totalorder %s17, 0
    %p44 = por %p42, %p43
    %s46 = sadd.s32 %s45, 1
    %p49 = scmp.eq.s32.totalorder %s11, 1
    %p50 = scmp.ne.s32.totalorder %s45, %s47
    %p51 = scmp.eq.s32.totalorder %s11, 0
    %p52 = por %p50, %p51
    %p53 = scmp.ne.s32.totalorder %s45, %s47
    %p54 = scmp.eq.s32.totalorder %s16, 1
    %p55 = por %p53, %p54
    %p56 = scmp.ne.s32.totalorder %s47, %s48
    %p57 = scmp.eq.s32.totalorder %s16, 0
    %p58 = por %p56, %p57
    %p59 = scmp.ne.s32.totalorder %s47, %s48
    %p60 = scmp.eq.s32.totalorder %s17, 1
    %p61 = por %p59, %p60
    %p63 = scmp.ne.s32.totalorder %s48, %s62
    %p64 = scmp.eq.s32.totalorder %s17, 0
    %p65 = por %p63, %p64
    %s67 = sadd.s32 %s66, 1
    %p70 = scmp.eq.s32.totalorder %s11, 1
    %p71 = scmp.ne.s32.totalorder %s66, %s68
    %p72 = scmp.eq.s32.totalorder %s11, 0
    %p73 = por %p71, %p72
    %p74 = scmp.ne.s32.totalorder %s66, %s68
    %p75 = scmp.eq.s32.totalorder %s16, 1
    %p76 = por %p74, %p75
    %p77 = scmp.ne.s32.totalorder %s68, %s69
    %p78 = scmp.eq.s32.totalorder %s16, 0
    %p79 = por %p77, %p78
    %p80 = scmp.ne.s32.totalorder %s68, %s69
    %p81 = scmp.eq.s32.totalorder %s17, 1
    %p82 = por %p80, %p81
    %p84 = scmp.ne.s32.totalorder %s69, %s83
    %p85 = scmp.eq.s32.totalorder %s17, 0
    %p86 = por %p84, %p85
    %s88 = sadd.s32 %s87, 1
    %p91 = scmp.eq.s32.totalorder %s11, 1
    %p92 = scmp.ne.s32.totalorder %s87, %s89
    %p93 = scmp.eq.s32.totalorder %s11, 0
    %p94 = por %p92, %p93
    %p95 = scmp.ne.s32.totalorder %s87, %s89
    %p96 = scmp.eq.s32.totalorder %s16, 1
    %p97 = por %p95, %p96
    %p98 = scmp.ne.s32.totalorder %s89, %s90
    %p99 = scmp.eq.s32.totalorder %s16, 0
    %p100 = por %p98, %p99
    %p101 = scmp.ne.s32.totalorder %s89, %s90
    %p102 = scmp.eq.s32.totalorder %s17, 1
    %p103 = por %p101, %p102
    %p105 = scmp.ne.s32.totalorder %s90, %s104
    %p106 = scmp.eq.s32.totalorder %s17, 0
    %p107 = por %p105, %p106
    %s109 = sadd.s32 %s108, 1
    %p112 = scmp.eq.s32.totalorder %s11, 1
    %p113 = scmp.ne.s32.totalorder %s108, %s110
    %p114 = scmp.eq.s32.totalorder %s11, 0
    %p115 = por %p113, %p114
    %p116 = scmp.ne.s32.totalorder %s108, %s110
    %p117 = scmp.eq.s32.totalorder %s16, 1
    %p118 = por %p116, %p117
    %p119 = scmp.ne.s32.totalorder %s110, %s111
    %p120 = scmp.eq.s32.totalorder %s16, 0
    %p121 = por %p119, %p120
    %p122 = scmp.ne.s32.totalorder %s110, %s111
    %p123 = scmp.eq.s32.totalorder %s17, 1
    %p124 = por %p122, %p123
    %p126 = scmp.ne.s32.totalorder %s111, %s125
    %p127 = scmp.eq.s32.totalorder %s17, 0
    %p128 = por %p126, %p127
    %s129 = ssub.s32 %s11, %s18
    %p130 = scmp.eq.s32.totalorder %s129, 0
    %s132 = sadd.s32 %s131, 1
    %s133 = scalar_select %p130, %s131, %s132
    %p136 = pneg %p130
    %p137 = scmp.eq.s32.totalorder %s11, 1
    %p138 = por %p136, %p137
    %p139 = scmp.ne.s32.totalorder %s131, %s134
    %p140 = scmp.eq.s32.totalorder %s11, 0
    %p141 = por %p139, %p140
    %p142 = scmp.ne.s32.totalorder %s131, %s134
    %p143 = scmp.eq.s32.totalorder %s16, 1
    %p144 = por %p142, %p143
    %p145 = scmp.ne.s32.totalorder %s134, %s135
    %p146 = scmp.eq.s32.totalorder %s16, 0
    %p147 = por %p145, %p146
    %p148 = scmp.ne.s32.totalorder %s134, %s135
    %p149 = scmp.eq.s32.totalorder %s17, 1
    %p150 = por %p148, %p149
    %p152 = scmp.ne.s32.totalorder %s135, %s151
    %p153 = scmp.eq.s32.totalorder %s17, 0
    %p154 = por %p152, %p153
    %p155 = scmp.le.s32.totalorder 1, %s11
    %p156 = scmp.lt.s32.totalorder %s11, 3
    %p157 = pnand %p155, %p156
    %p158 = pneg %p157
    // Predicated region
    $region9: #{tpu_custom_call.1} parent=5 // pred_check
      _
    $region10: #{tpu_custom_call.1} parent=5 // pred_check_branch
      %160 = sbr.rel (%p157) target = $region12
    $region11: #{tpu_custom_call.1} parent=5 // pred_region
      %s161 = ssub.s32 %s11, 1
      // Predicated region
      $region13: #{tpu_custom_call.1} parent=11 // pred_check
        %p162 = pneg %p58
      $region14: #{tpu_custom_call.1} parent=11 // pred_check_branch
        %164 = sbr.rel (%p162) target = $region16
      $region15: #{tpu_custom_call.1} parent=11 // pred_region
        _
      $region16: #{tpu_custom_call.1} parent=11 // pred_fallthru
        _
      // Predicated region
      $region17: #{tpu_custom_call.1} parent=11 // pred_check
        %p165 = pneg %p79
      $region18: #{tpu_custom_call.1} parent=11 // pred_check_branch
        %167 = sbr.rel (%p165) target = $region20
      $region19: #{tpu_custom_call.1} parent=11 // pred_region
        _
      $region20: #{tpu_custom_call.1} parent=11 // pred_fallthru
        _
      // Predicated region
      $region21: #{tpu_custom_call.1} parent=11 // pred_check
        %p168 = pneg %p100
      $region22: #{tpu_custom_call.1} parent=11 // pred_check_branch
        %170 = sbr.rel (%p168) target = $region24
      $region23: #{tpu_custom_call.1} parent=11 // pred_region
        _
      $region24: #{tpu_custom_call.1} parent=11 // pred_fallthru
        _
      // Predicated region
      $region25: #{tpu_custom_call.1} parent=11 // pred_check
        %p171 = pneg %p121
      $region26: #{tpu_custom_call.1} parent=11 // pred_check_branch
        %173 = sbr.rel (%p171) target = $region28
      $region27: #{tpu_custom_call.1} parent=11 // pred_region
        _
      $region28: #{tpu_custom_call.1} parent=11 // pred_fallthru
        _
    $region12: #{tpu_custom_call.1} parent=5 // pred_fallthru
      _
    %p174 = scmp.lt.s32.totalorder %s11, 2
    // Predicated region
    $region29: #{tpu_custom_call.1} parent=5 // pred_check
      %p175 = pneg %p174
    $region30: #{tpu_custom_call.1} parent=5 // pred_check_branch
      %177 = sbr.rel (%p175) target = $region32
    $region31: #{tpu_custom_call.1} parent=5 // pred_region
      // Predicated region
      $region33: #{tpu_custom_call.1} parent=31 // pred_check
        %p178 = pneg %p31
      $region34: #{tpu_custom_call.1} parent=31 // pred_check_branch
        %180 = sbr.rel (%p178) target = $region36
      $region35: #{tpu_custom_call.1} parent=31 // pred_region
        %s181 = smul.u32 2, %s11
        %p182 = scmp.lt.s32.totalorder %s181, 3
        %s183 = scalar_select %p182, %s181, 3
        %s184 = smul.addr %s183, 4
        %s185 = scalar_lea.vmem %s0, %s184
        %s186 = smul.u32 2, %s11
      $region36: #{tpu_custom_call.1} parent=31 // pred_fallthru
        _
    $region32: #{tpu_custom_call.1} parent=5 // pred_fallthru
      _
    %p187 = scmp.le.s32.totalorder 1, %s11
    %p188 = scmp.lt.s32.totalorder %s11, 3
    %p189 = pnand %p187, %p188
    %p190 = pneg %p189
    // Predicated region
    $region37: #{tpu_custom_call.1} parent=5 // pred_check
      _
    $region38: #{tpu_custom_call.1} parent=5 // pred_check_branch
      %192 = sbr.rel (%p189) target = $region40
    $region39: #{tpu_custom_call.1} parent=5 // pred_region
      %s193 = ssub.s32 %s11, 1
      %s194 = smul.u32 2, %s16
      %p195 = scmp.lt.s32.totalorder %s194, 3
      %s196 = scalar_select %p195, %s194, 3
      %s197 = smul.addr %s196, 4
      %s198 = scalar_lea.vmem %s0, %s197
      %p199 = pneg %p37
      %p200 = pneg %p34
      %p201 = pneg %p58
      %p202 = pneg %p55
      %p203 = pneg %p79
      %p204 = pneg %p76
      %p205 = pneg %p100
      %p206 = pneg %p97
      %p207 = pneg %p121
      %p208 = pneg %p118
      %p209 = pneg %p147
      %p210 = pneg %p144
      %s211 = smul.u32 2, %s16
      %p212 = scmp.lt.s32.totalorder %s211, 3
      %s213 = scalar_select %p212, %s211, 3
      %s214 = smul.addr %s213, 8
      %s215 = scalar_lea.vmem %s5, %s214
      %s216 = smul.u32 2, %s16
      %p217 = scmp.lt.s32.totalorder %s216, 3
      %s218 = scalar_select %p217, %s216, 3
      %s219 = smul.addr %s218, 4
      %s220 = scalar_lea.vmem %s0, %s219
      %s221 = smul.u32 2, %s16
      %s222 = smul.u32 2, %s16
      %p223 = scmp.lt.s32.totalorder %s222, 3
      %s224 = scalar_select %p223, %s222, 3
      %s225 = smul.addr %s224, 8
      %s226 = scalar_lea.vmem %s5, %s225
      %s227 = smul.u32 2, %s16
      %v229 = vld [vmem:[%s220] sm:$0xf]
      %v230 = vld [vmem:[%s220 + $0x4] sm:$0xf]
      %v231 = vld [vmem:[%s1] sm:$0xf]
      %v232 = vld [vmem:[%s1 + $0x4] sm:$0xf]
      %v235 = vunpack.c.l.b16 %v229
      %v236 = vunpack.c.l.b16 %v230
      %v237 = vpack.c.b16 %v236, %v235
      %v240 = vunpack.c.l.b16 %v231
      %v241 = vunpack.c.l.b16 %v232
      %v242 = vpack.c.b16 %v241, %v240
      %vm244 = vcmask 130048
      %v246 = vsel %vm244, %v237, 0
      %248 = vmatprep.subr.bf16.mxu0 0
      %249 = vmatpush1.bf16.msra.mxu0 %v242
      %250 = vmatprep.subr.bf16.mxu0 0
      %251 = vmatpush1.bf16.msra.mxu0 0
      %252 = vmatprep.subr.bf16.mxu0 0
      %253 = vmatpush1.bf16.msra.mxu0 0
      %254 = vmatprep.subr.bf16.mxu0 0
      %255 = vmatpush1.bf16.msra.mxu0 0
      %256 = vmatprep.subr.bf16.mxu0 0
      %257 = vmatpush1.bf16.msra.mxu0 0
      %258 = vmatprep.subr.bf16.mxu0 0
      %259 = vmatpush1.bf16.msra.mxu0 0
      %260 = vmatprep.subr.bf16.mxu0 0
      %261 = vmatpush1.bf16.msra.mxu0 0
      %262 = vmatprep.subr.bf16.mxu0 0
      %263 = vmatpush1.bf16.msra.mxu0 0
      %264 = vmatprep.subr.bf16.mxu0 0
      %265 = vmatpush1.bf16.msra.mxu0 0
      %266 = vmatprep.subr.bf16.mxu0 0
      %267 = vmatpush1.bf16.msra.mxu0 0
      %268 = vmatprep.subr.bf16.mxu0 0
      %269 = vmatpush1.bf16.msra.mxu0 0
      %270 = vmatprep.subr.bf16.mxu0 0
      %271 = vmatpush1.bf16.msra.mxu0 0
      %272 = vmatprep.subr.bf16.mxu0 0
      %273 = vmatpush1.bf16.msra.mxu0 0
      %274 = vmatprep.subr.bf16.mxu0 0
      %275 = vmatpush1.bf16.msra.mxu0 0
      %276 = vmatprep.subr.bf16.mxu0 0
      %277 = vmatpush1.bf16.msra.mxu0 0
      %278 = vmatprep.subr.bf16.mxu0 0
      %279 = vmatpush1.bf16.msra.mxu0 0
      %280 = vmatprep.mubr.bf16.mxu0 0
      %281 = vmatmul.mubr.bf16.gmra.mrb[0].mxu0 %v246
      %v282 = vpop.f32.mrb[0].mxu0
      %v283 = vadd.f32 0.0, %v282
      %v284 = vpop.f32.mrb[0].mxu0
      %v285 = vpop.f32.mrb[0].mxu0
      %v286 = vadd.f32 0.0, %v285
      %v287 = vpop.f32.mrb[0].mxu0
      %288 = vdwg.mxu0
      %289 = vrot.lane.b32.xlu0 %v283, 64
      %v290 = vpop.permute.xlu0 %289
      %291 = vrot.lane.b32.xlu0 %v286, 64
      %v292 = vpop.permute.xlu0 %291
      %v293 = vld [vmem:[%s2] sm:$0xf]
      %v294 = vunpack.c.l.bf16 %v293
      %v295 = vlaneseq
      %v296 = vshrl.u32 %v295, 7
      %v297 = vsub.s32 0, %v296
      %v298 = vrot.slane %v283, %v297
      %v299 = vlaneseq
      %v300 = vshrl.u32 %v299, 7
      %v301 = vsub.s32 0, %v300
      %v302 = vrot.slane %v286, %v301
      %v303 = vmul.f32 %v298, %v294
      %v304 = vmul.f32 %v302, %v294
      %v305 = vadd.f32 %v303, 0.0
      %v306 = vadd.f32 %v304, 0.0
      %v307 = vld [vmem:[%s3] sm:$0xf]
      %v308 = vunpack.c.l.bf16 %v307
      %v309 = vlaneseq
      %v310 = vshrl.u32 %v309, 7
      %v311 = vsub.s32 0, %v310
      %v312 = vrot.slane %v290, %v311
      %v313 = vlaneseq
      %v314 = vshrl.u32 %v313, 7
      %v315 = vsub.s32 0, %v314
      %v316 = vrot.slane %v292, %v315
      %v317 = vmul.f32 %v312, %v308
      %v318 = vmul.f32 %v316, %v308
      %v319 = vadd.f32 %v305, %v317
      %v320 = vadd.f32 %v306, %v318
      %s321 = scalar_lea.vmem %s2, 4
      %v322 = vld [vmem:[%s321] sm:$0xf]
      %v323 = vunpack.c.l.bf16 %v322
      %v324 = vlaneseq
      %v325 = vshrl.u32 %v324, 7
      %v326 = vsub.s32 1, %v325
      %v327 = vrot.slane %v283, %v326
      %v328 = vlaneseq
      %v329 = vshrl.u32 %v328, 7
      %v330 = vsub.s32 1, %v329
      %v331 = vrot.slane %v286, %v330
      %v332 = vmul.f32 %v327, %v323
      %v333 = vmul.f32 %v331, %v323
      %v334 = vadd.f32 %v319, %v332
      %v335 = vadd.f32 %v320, %v333
      %s336 = scalar_lea.vmem %s3, 4
      %v337 = vld [vmem:[%s336] sm:$0xf]
      %v338 = vunpack.c.l.bf16 %v337
      %v339 = vlaneseq
      %v340 = vshrl.u32 %v339, 7
      %v341 = vsub.s32 1, %v340
      %v342 = vrot.slane %v290, %v341
      %v343 = vlaneseq
      %v344 = vshrl.u32 %v343, 7
      %v345 = vsub.s32 1, %v344
      %v346 = vrot.slane %v292, %v345
      %v347 = vmul.f32 %v342, %v338
      %v348 = vmul.f32 %v346, %v338
      %v349 = vadd.f32 %v334, %v347
      %v350 = vadd.f32 %v335, %v348
      %s351 = scalar_lea.vmem %s2, 8
      %v352 = vld [vmem:[%s351] sm:$0xf]
      %v353 = vunpack.c.l.bf16 %v352
      %v354 = vlaneseq
      %v355 = vshrl.u32 %v354, 7
      %v356 = vsub.s32 2, %v355
      %v357 = vrot.slane %v283, %v356
      %v358 = vlaneseq
      %v359 = vshrl.u32 %v358, 7
      %v360 = vsub.s32 2, %v359
      %v361 = vrot.slane %v286, %v360
      %v362 = vmul.f32 %v357, %v353
      %v363 = vmul.f32 %v361, %v353
      %v364 = vadd.f32 %v349, %v362
      %v365 = vadd.f32 %v350, %v363
      %s366 = scalar_lea.vmem %s3, 8
      %v367 = vld [vmem:[%s366] sm:$0xf]
      %v368 = vunpack.c.l.bf16 %v367
      %v369 = vlaneseq
      %v370 = vshrl.u32 %v369, 7
      %v371 = vsub.s32 2, %v370
      %v372 = vrot.slane %v290, %v371
      %v373 = vlaneseq
      %v374 = vshrl.u32 %v373, 7
      %v375 = vsub.s32 2, %v374
      %v376 = vrot.slane %v292, %v375
      %v377 = vmul.f32 %v372, %v368
      %v378 = vmul.f32 %v376, %v368
      %v379 = vadd.f32 %v364, %v377
      %v380 = vadd.f32 %v365, %v378
      %s381 = scalar_lea.vmem %s2, 12
      %v382 = vld [vmem:[%s381] sm:$0xf]
      %v383 = vunpack.c.l.bf16 %v382
      %v384 = vlaneseq
      %v385 = vshrl.u32 %v384, 7
      %v386 = vsub.s32 3, %v385
      %v387 = vrot.slane %v283, %v386
      %v388 = vlaneseq
      %v389 = vshrl.u32 %v388, 7
      %v390 = vsub.s32 3, %v389
      %v391 = vrot.slane %v286, %v390
      %v392 = vmul.f32 %v387, %v383
      %v393 = vmul.f32 %v391, %v383
      %v394 = vadd.f32 %v379, %v392
      %v395 = vadd.f32 %v380, %v393
      %s396 = scalar_lea.vmem %s3, 12
      %v397 = vld [vmem:[%s396] sm:$0xf]
      %v398 = vunpack.c.l.bf16 %v397
      %v399 = vlaneseq
      %v400 = vshrl.u32 %v399, 7
      %v401 = vsub.s32 3, %v400
      %v402 = vrot.slane %v290, %v401
      %v403 = vlaneseq
      %v404 = vshrl.u32 %v403, 7
      %v405 = vsub.s32 3, %v404
      %v406 = vrot.slane %v292, %v405
      %v407 = vmul.f32 %v402, %v398
      %v408 = vmul.f32 %v406, %v398
      %v409 = vadd.f32 %v394, %v407
      %v410 = vadd.f32 %v395, %v408
      %s411 = scalar_lea.vmem %s2, 16
      %v412 = vld [vmem:[%s411] sm:$0xf]
      %v413 = vunpack.c.l.bf16 %v412
      %v414 = vlaneseq
      %v415 = vshrl.u32 %v414, 7
      %v416 = vsub.s32 4, %v415
      %v417 = vrot.slane %v283, %v416
      %v418 = vlaneseq
      %v419 = vshrl.u32 %v418, 7
      %v420 = vsub.s32 4, %v419
      %v421 = vrot.slane %v286, %v420
      %v422 = vmul.f32 %v417, %v413
      %v423 = vmul.f32 %v421, %v413
      %v424 = vadd.f32 %v409, %v422
      %v425 = vadd.f32 %v410, %v423
      %s426 = scalar_lea.vmem %s3, 16
      %v427 = vld [vmem:[%s426] sm:$0xf]
      %v428 = vunpack.c.l.bf16 %v427
      %v429 = vlaneseq
      %v430 = vshrl.u32 %v429, 7
      %v431 = vsub.s32 4, %v430
      %v432 = vrot.slane %v290, %v431
      %v433 = vlaneseq
      %v434 = vshrl.u32 %v433, 7
      %v435 = vsub.s32 4, %v434
      %v436 = vrot.slane %v292, %v435
      %v437 = vmul.f32 %v432, %v428
      %v438 = vmul.f32 %v436, %v428
      %v439 = vadd.f32 %v424, %v437
      %v440 = vadd.f32 %v425, %v438
      %s441 = scalar_lea.vmem %s2, 20
      %v442 = vld [vmem:[%s441] sm:$0xf]
      %v443 = vunpack.c.l.bf16 %v442
      %v444 = vlaneseq
      %v445 = vshrl.u32 %v444, 7
      %v446 = vsub.s32 5, %v445
      %v447 = vrot.slane %v283, %v446
      %v448 = vlaneseq
      %v449 = vshrl.u32 %v448, 7
      %v450 = vsub.s32 5, %v449
      %v451 = vrot.slane %v286, %v450
      %v452 = vmul.f32 %v447, %v443
      %v453 = vmul.f32 %v451, %v443
      %v454 = vadd.f32 %v439, %v452
      %v455 = vadd.f32 %v440, %v453
      %s456 = scalar_lea.vmem %s3, 20
      %v457 = vld [vmem:[%s456] sm:$0xf]
      %v458 = vunpack.c.l.bf16 %v457
      %v459 = vlaneseq
      %v460 = vshrl.u32 %v459, 7
      %v461 = vsub.s32 5, %v460
      %v462 = vrot.slane %v290, %v461
      %v463 = vlaneseq
      %v464 = vshrl.u32 %v463, 7
      %v465 = vsub.s32 5, %v464
      %v466 = vrot.slane %v292, %v465
      %v467 = vmul.f32 %v462, %v458
      %v468 = vmul.f32 %v466, %v458
      %v469 = vadd.f32 %v454, %v467
      %v470 = vadd.f32 %v455, %v468
      %s471 = scalar_lea.vmem %s2, 24
      %v472 = vld [vmem:[%s471] sm:$0xf]
      %v473 = vunpack.c.l.bf16 %v472
      %v474 = vlaneseq
      %v475 = vshrl.u32 %v474, 7
      %v476 = vsub.s32 6, %v475
      %v477 = vrot.slane %v283, %v476
      %v478 = vlaneseq
      %v479 = vshrl.u32 %v478, 7
      %v480 = vsub.s32 6, %v479
      %v481 = vrot.slane %v286, %v480
      %v482 = vmul.f32 %v477, %v473
      %v483 = vmul.f32 %v481, %v473
      %v484 = vadd.f32 %v469, %v482
      %v485 = vadd.f32 %v470, %v483
      %s486 = scalar_lea.vmem %s3, 24
      %v487 = vld [vmem:[%s486] sm:$0xf]
      %v488 = vunpack.c.l.bf16 %v487
      %v489 = vlaneseq
      %v490 = vshrl.u32 %v489, 7
      %v491 = vsub.s32 6, %v490
      %v492 = vrot.slane %v290, %v491
      %v493 = vlaneseq
      %v494 = vshrl.u32 %v493, 7
      %v495 = vsub.s32 6, %v494
      %v496 = vrot.slane %v292, %v495
      %v497 = vmul.f32 %v492, %v488
      %v498 = vmul.f32 %v496, %v488
      %v499 = vadd.f32 %v484, %v497
      %v500 = vadd.f32 %v485, %v498
      %s501 = scalar_lea.vmem %s2, 28
      %v502 = vld [vmem:[%s501] sm:$0xf]
      %v503 = vunpack.c.l.bf16 %v502
      %v504 = vlaneseq
      %v505 = vshrl.u32 %v504, 7
      %v506 = vsub.s32 7, %v505
      %v507 = vrot.slane %v283, %v506
      %v508 = vlaneseq
      %v509 = vshrl.u32 %v508, 7
      %v510 = vsub.s32 7, %v509
      %v511 = vrot.slane %v286, %v510
      %v512 = vmul.f32 %v507, %v503
      %v513 = vmul.f32 %v511, %v503
      %v514 = vadd.f32 %v499, %v512
      %v515 = vadd.f32 %v500, %v513
      %s516 = scalar_lea.vmem %s3, 28
      %v517 = vld [vmem:[%s516] sm:$0xf]
      %v518 = vunpack.c.l.bf16 %v517
      %v519 = vlaneseq
      %v520 = vshrl.u32 %v519, 7
      %v521 = vsub.s32 7, %v520
      %v522 = vrot.slane %v290, %v521
      %v523 = vlaneseq
      %v524 = vshrl.u32 %v523, 7
      %v525 = vsub.s32 7, %v524
      %v526 = vrot.slane %v292, %v525
      %v527 = vmul.f32 %v522, %v518
      %v528 = vmul.f32 %v526, %v518
      %v529 = vadd.f32 %v514, %v527
      %v530 = vadd.f32 %v515, %v528
      %v531 = vpack.c.bf16 %v530, %v529
      %v532 = vld [vmem:[%s4] sm:$0xf]
      %v533 = vld [vmem:[%s4 + $0x4] sm:$0xf]
      %v534 = vld [vmem:[%s4 + $0x8] sm:$0xf]
      %v535 = vld [vmem:[%s4 + $0xc] sm:$0xf]
      %v536 = vld [vmem:[%s4 + $0x10] sm:$0xf]
      %v537 = vld [vmem:[%s4 + $0x14] sm:$0xf]
      %v538 = vld [vmem:[%s4 + $0x18] sm:$0xf]
      %v539 = vld [vmem:[%s4 + $0x1c] sm:$0xf]
      %v540 = vld [vmem:[%s4 + $0x20] sm:$0xf]
      %v541 = vld [vmem:[%s4 + $0x24] sm:$0xf]
      %v542 = vld [vmem:[%s4 + $0x28] sm:$0xf]
      %v543 = vld [vmem:[%s4 + $0x2c] sm:$0xf]
      %v544 = vld [vmem:[%s4 + $0x30] sm:$0xf]
      %v545 = vld [vmem:[%s4 + $0x34] sm:$0xf]
      %v546 = vld [vmem:[%s4 + $0x38] sm:$0xf]
      %v547 = vld [vmem:[%s4 + $0x3c] sm:$0xf]
      %v564 = vunpack.c.l.b16 %v532
      %v565 = vunpack.c.l.b16 %v533
      %v566 = vunpack.c.l.b16 %v534
      %v567 = vunpack.c.l.b16 %v535
      %v568 = vunpack.c.l.b16 %v536
      %v569 = vunpack.c.l.b16 %v537
      %v570 = vunpack.c.l.b16 %v538
      %v571 = vunpack.c.l.b16 %v539
      %v572 = vunpack.c.l.b16 %v540
      %v573 = vunpack.c.l.b16 %v541
      %v574 = vunpack.c.l.b16 %v542
      %v575 = vunpack.c.l.b16 %v543
      %v576 = vunpack.c.l.b16 %v544
      %v577 = vunpack.c.l.b16 %v545
      %v578 = vunpack.c.l.b16 %v546
      %v579 = vunpack.c.l.b16 %v547
      %v580 = vpack.c.b16 %v565, %v564
      %v581 = vpack.c.b16 %v567, %v566
      %v582 = vpack.c.b16 %v569, %v568
      %v583 = vpack.c.b16 %v571, %v570
      %v584 = vpack.c.b16 %v573, %v572
      %v585 = vpack.c.b16 %v575, %v574
      %v586 = vpack.c.b16 %v577, %v576
      %v587 = vpack.c.b16 %v579, %v578
      %596 = vmatprep.subr.bf16.mxu0 0
      %597 = vmatpush1.bf16.msra.mxu0 %v580
      %598 = vmatprep.subr.bf16.mxu0 0
      %599 = vmatpush1.bf16.msra.mxu0 %v581
      %600 = vmatprep.subr.bf16.mxu0 0
      %601 = vmatpush1.bf16.msra.mxu0 %v582
      %602 = vmatprep.subr.bf16.mxu0 0
      %603 = vmatpush1.bf16.msra.mxu0 %v583
      %604 = vmatprep.subr.bf16.mxu0 0
      %605 = vmatpush1.bf16.msra.mxu0 %v584
      %606 = vmatprep.subr.bf16.mxu0 0
      %607 = vmatpush1.bf16.msra.mxu0 %v585
      %608 = vmatprep.subr.bf16.mxu0 0
      %609 = vmatpush1.bf16.msra.mxu0 %v586
      %610 = vmatprep.subr.bf16.mxu0 0
      %611 = vmatpush1.bf16.msra.mxu0 %v587
      %612 = vmatprep.subr.bf16.mxu0 0
      %613 = vmatpush1.bf16.msra.mxu0 0
      %614 = vmatprep.subr.bf16.mxu0 0
      %615 = vmatpush1.bf16.msra.mxu0 0
      %616 = vmatprep.subr.bf16.mxu0 0
      %617 = vmatpush1.bf16.msra.mxu0 0
      %618 = vmatprep.subr.bf16.mxu0 0
      %619 = vmatpush1.bf16.msra.mxu0 0
      %620 = vmatprep.subr.bf16.mxu0 0
      %621 = vmatpush1.bf16.msra.mxu0 0
      %622 = vmatprep.subr.bf16.mxu0 0
      %623 = vmatpush1.bf16.msra.mxu0 0
      %624 = vmatprep.subr.bf16.mxu0 0
      %625 = vmatpush1.bf16.msra.mxu0 0
      %626 = vmatprep.subr.bf16.mxu0 0
      %627 = vmatpush1.bf16.msra.mxu0 0
      %628 = vmatprep.mubr.bf16.mxu0 0
      %629 = vmatmul.mubr.bf16.gmra.mrb[0].mxu0 %v531
      %v630 = vpop.f32.mrb[0].mxu0
      %v631 = vadd.f32 0.0, %v630
      %v632 = vpop.f32.mrb[0].mxu0
      %v633 = vpop.f32.mrb[0].mxu0
      %v634 = vadd.f32 0.0, %v633
      %v635 = vpop.f32.mrb[0].mxu0
      %636 = vdwg.mxu0
      %637 = vst.msk [vmem:[%s226] sm:$0xff] %vm244, %v631
      %638 = vst.msk [vmem:[%s226 + $0x8] sm:$0xff] %vm244, %v634
      %s639 = smul.u32 2, %s16
      %p640 = scmp.lt.s32.totalorder %s639, 3
      %s641 = scalar_select %p640, %s639, 3
      %s642 = smul.addr %s641, 8
      %s643 = scalar_lea.vmem %s5, %s642
      // Predicated region
      $region41: #{tpu_custom_call.1} parent=39 // pred_check
        %p644 = pneg %p144
      $region42: #{tpu_custom_call.1} parent=39 // pred_check_branch
        %646 = sbr.rel (%p644) target = $region44
      $region43: #{tpu_custom_call.1} parent=39 // pred_region
        %s647 = smul.u32 2, %s16
      $region44: #{tpu_custom_call.1} parent=39 // pred_fallthru
        _
    $region40: #{tpu_custom_call.1} parent=5 // pred_fallthru
      _
    %p648 = scmp.le.s32.totalorder 2, %s11
    // Predicated region
    $region45: #{tpu_custom_call.1} parent=5 // pred_check
      %p649 = pneg %p648
    $region46: #{tpu_custom_call.1} parent=5 // pred_check_branch
      %651 = sbr.rel (%p649) target = $region48
    $region47: #{tpu_custom_call.1} parent=5 // pred_region
      %s652 = ssub.s32 %s11, 2
      // Predicated region
      $region49: #{tpu_custom_call.1} parent=47 // pred_check
        %p653 = pneg %p150
      $region50: #{tpu_custom_call.1} parent=47 // pred_check_branch
        %655 = sbr.rel (%p653) target = $region52
      $region51: #{tpu_custom_call.1} parent=47 // pred_region
        %s656 = smul.u32 2, %s17
        %p657 = scmp.lt.s32.totalorder %s656, 3
        %s658 = scalar_select %p657, %s656, 3
        %s659 = smul.addr %s658, 8
        %s660 = scalar_lea.vmem %s5, %s659
      $region52: #{tpu_custom_call.1} parent=47 // pred_fallthru
        _
    $region48: #{tpu_custom_call.1} parent=5 // pred_fallthru
      _
  $region6: #{tpu_custom_call.1} parent=0 // loop_footer
    %s15 = sadd.s32 1, %s11
  $region7: #{tpu_custom_call.1} parent=0 // loop_footer_branch
    %10 = sbr.rel target = $region3
  $region8: #{tpu_custom_call.1} parent=0 // loop_exit
    _

</llo_original>
